<compile_context>
chip_gen: v6e
topology: v6e:2x2x1
jax: 0.10.0
libtpu: 0.0.40
codegen_flags: <defaults>
</compile_context>

<pallas_src>
import jax
import jax.numpy as jnp
from jax import lax
from jax.experimental import pallas as pl
from jax.experimental.pallas import tpu as pltpu


def expl_to_labels_kernel(x_ref,
                          wih_f_ref, wih_b_ref, b_ref, whh_ref,
                          w1_ref, b1_ref, w2_ref, b2_ref, w3_ref, b3_ref,
                          out_ref):
    T, B, D = x_ref.shape
    H2 = whh_ref.shape[0]            # 2*H  : packed hidden  [fwd | bwd]
    # gates layout (gate-major): [i_f,i_b, f_f,f_b, g_f,g_b, o_f,o_b], total 8*H = 4*H2 lanes

    # ---- input-side gate pre-activations, hoisted off the h->h critical path ----
    bias = b_ref[...]                                                    # (1, 8H)
    xf = [jnp.dot(x_ref[t], wih_f_ref[...], preferred_element_type=jnp.float32)
          for t in range(T)]                                             # fwd slots filled
    xb = [jnp.dot(x_ref[t], wih_b_ref[...], preferred_element_type=jnp.float32)
          for t in range(T)]                                             # bwd slots filled
    # backward direction processes x[T-1-t] at step t -> bake the reversal in statically
    xw = [xf[t] + xb[T - 1 - t] + bias for t in range(T)]                # each (B, 8H)

    # ---- fused bidirectional LSTM recurrence + online max-pool (fully unrolled) ----
    # TODO(synk): no sequence-length masking (PyTorch pack_padded_sequence); padded steps
    #             would leak into the max-pool if variable lengths were ever used.
    whh = whh_ref[...]                                                   # (2H, 8H) block-structured
    h = jnp.zeros((B, H2), jnp.float32)                                  # [h_fwd | h_bwd]
    c = jnp.zeros((B, H2), jnp.float32)
    m = jnp.full((B, H2), -jnp.inf, jnp.float32)
    for t in range(T):
        gates = xw[t] + jnp.dot(h, whh, preferred_element_type=jnp.float32)   # (B, 8H)
        i = jax.nn.sigmoid(gates[:, 0 * H2:1 * H2])
        f = jax.nn.sigmoid(gates[:, 1 * H2:2 * H2])
        g = jnp.tanh(gates[:, 2 * H2:3 * H2])
        o = jax.nn.sigmoid(gates[:, 3 * H2:4 * H2])
        c = f * c + i * g
        h = o * jnp.tanh(c)
        m = jnp.maximum(m, h)                                            # max-pool over time

    emb = m                                                              # (B, 2H) == [max fwd | max bwd]

    # ---- classifier: (Dropout -> Linear -> Tanh) x2 -> Linear(3); dropout == identity ----
    h1 = jnp.tanh(jnp.dot(emb, w1_ref[...], preferred_element_type=jnp.float32) + b1_ref[...])
    h2 = jnp.tanh(jnp.dot(h1, w2_ref[...], preferred_element_type=jnp.float32) + b2_ref[...])
    # lane-padded (B, 128) output -> unmasked store; real logits are columns [:n_classes]
    out_ref[...] = jnp.dot(h2, w3_ref[...], preferred_element_type=jnp.float32) + b3_ref[...]


def pack_params(params, out_pad=128):
    """Pack natural per-gate LSTM params into fused, MXU-friendly layouts."""
    (wih_f, whh_f, b_f, wih_b, whh_b, b_b, w1, b1, w2, b2, w3, b3) = params
    ngates, D, H = wih_f.shape
    assert ngates == 4
    G = 8 * H   # 4 gates x 2 directions, gate-major: [i_f,i_b,f_f,f_b,g_f,g_b,o_f,o_b]

    wih_f_big = jnp.zeros((D, G), jnp.float32)
    wih_b_big = jnp.zeros((D, G), jnp.float32)
    b_big = jnp.zeros((1, G), jnp.float32)
    whh_big = jnp.zeros((2 * H, G), jnp.float32)
    for g in range(4):
        fs = slice((2 * g) * H, (2 * g + 1) * H)        # fwd slot of gate g
        bs = slice((2 * g + 1) * H, (2 * g + 2) * H)    # bwd slot of gate g
        wih_f_big = wih_f_big.at[:, fs].set(wih_f[g])
        wih_b_big = wih_b_big.at[:, bs].set(wih_b[g])
        b_big = b_big.at[:, fs].set(b_f[g])
        b_big = b_big.at[:, bs].set(b_b[g])
        whh_big = whh_big.at[0:H, fs].set(whh_f[g])     # h_fwd rows feed fwd slots only
        whh_big = whh_big.at[H:2 * H, bs].set(whh_b[g]) # h_bwd rows feed bwd slots only

    FC, NC = w3.shape
    w3p = jnp.zeros((FC, out_pad), jnp.float32).at[:, :NC].set(w3)
    b3p = jnp.zeros((1, out_pad), jnp.float32).at[:, :NC].set(b3)
    return (wih_f_big, wih_b_big, b_big, whh_big, w1, b1, w2, b2, w3p, b3p)


def expl_to_labels_forward(x, packed_params, n_classes):
    T, B, D = x.shape
    out_pad = packed_params[-1].shape[-1]
    n_in = 1 + len(packed_params)
    out = pl.pallas_call(
        expl_to_labels_kernel,
        out_shape=jax.ShapeDtypeStruct((B, out_pad), jnp.float32),
        in_specs=[pl.BlockSpec(memory_space=pltpu.MemorySpace.VMEM)] * n_in,
        out_specs=pl.BlockSpec(memory_space=pltpu.MemorySpace.VMEM),
    )(x, *packed_params)
    return out[:, :n_classes]


def reference_forward(x, params):
    (wih_f, whh_f, b_f, wih_b, whh_b, b_b, w1, b1, w2, b2, w3, b3) = params

    def lstm_max(wih, whh, b, xs):
        T, B, D = xs.shape
        H = whh.shape[-1]

        def step(carry, xt):
            h, c = carry
            gs = [xt @ wih[g] + h @ whh[g] + b[g] for g in range(4)]
            i = jax.nn.sigmoid(gs[0]); f = jax.nn.sigmoid(gs[1])
            g = jnp.tanh(gs[2]); o = jax.nn.sigmoid(gs[3])
            c = f * c + i * g
            h = o * jnp.tanh(c)
            return (h, c), h

        (_, _), hs = lax.scan(step, (jnp.zeros((B, H)), jnp.zeros((B, H))), xs)
        return hs.max(axis=0)

    emb = jnp.concatenate([lstm_max(wih_f, whh_f, b_f, x),
                           lstm_max(wih_b, whh_b, b_b, x[::-1])], axis=-1)
    h1 = jnp.tanh(emb @ w1 + b1)
    h2 = jnp.tanh(h1 @ w2 + b2)
    return h2 @ w3 + b3


if __name__ == "__main__":
    T, B, D = 8, 8, 32          # seq_len, batch, word_emb_dim
    H, FC, NC = 32, 64, 3       # enc_rnn_dim, fc_dim, n_classes

    key = jax.random.PRNGKey(0)
    ks = jax.random.split(key, 13)

    def init(k, shape, scale=0.1):
        return (scale * jax.random.normal(k, shape)).astype(jnp.float32)

    # LSTM weights, gate-stacked (i,f,g,o), pre-transposed for x @ W
    wih_f = init(ks[0], (4, D, H)); whh_f = init(ks[1], (4, H, H)); b_f = init(ks[2], (4, 1, H))
    wih_b = init(ks[3], (4, D, H)); whh_b = init(ks[4], (4, H, H)); b_b = init(ks[5], (4, 1, H))
    # classifier: Linear(2H->FC), Linear(FC->FC), Linear(FC->3)
    w1 = init(ks[6], (2 * H, FC)); b1 = init(ks[7], (1, FC))
    w2 = init(ks[8], (FC, FC));    b2 = init(ks[9], (1, FC))
    w3 = init(ks[10], (FC, NC));   b3 = init(ks[11], (1, NC))

    x = jax.random.normal(ks[12], (T, B, D)).astype(jnp.float32)

    params = (wih_f, whh_f, b_f, wih_b, whh_b, b_b, w1, b1, w2, b2, w3, b3)
    packed = pack_params(params)

    out = expl_to_labels_forward(x, packed, NC)
    jax.block_until_ready(out)

    ref = reference_forward(x, params)
    assert out.shape == (B, NC)
    assert jnp.allclose(out, ref, atol=5e-3, rtol=5e-3), float(jnp.max(jnp.abs(out - ref)))
    print("KERNEL_OK")
</pallas_src>

<mosaic_0001>
module attributes {stable_mosaic.version = 11 : i64} {
  func.func @expl_to_labels_kernel(%arg0: memref<8x8x32xf32, #tpu.memory_space<vmem>>, %arg1: memref<32x256xf32, #tpu.memory_space<vmem>>, %arg2: memref<32x256xf32, #tpu.memory_space<vmem>>, %arg3: memref<1x256xf32, #tpu.memory_space<vmem>>, %arg4: memref<64x256xf32, #tpu.memory_space<vmem>>, %arg5: memref<64x64xf32, #tpu.memory_space<vmem>>, %arg6: memref<1x64xf32, #tpu.memory_space<vmem>>, %arg7: memref<64x64xf32, #tpu.memory_space<vmem>>, %arg8: memref<1x64xf32, #tpu.memory_space<vmem>>, %arg9: memref<64x128xf32, #tpu.memory_space<vmem>>, %arg10: memref<1x128xf32, #tpu.memory_space<vmem>>, %arg11: memref<8x128xf32, #tpu.memory_space<vmem>>) attributes {dimension_semantics = [], scalar_prefetch = 0 : i64, scratch_operands = 0 : i64, tpu.core_type = #tpu.core_type<tc>} {
    %c0 = arith.constant 0 : index
    %c0_0 = arith.constant 0 : index
    %0 = vector.load %arg3[%c0, %c0_0] : memref<1x256xf32, #tpu.memory_space<vmem>>, vector<1x256xf32>
    %c0_1 = arith.constant 0 : index
    %c0_2 = arith.constant 0 : index
    %c0_3 = arith.constant 0 : index
    %1 = vector.load %arg0[%c0_1, %c0_2, %c0_3] : memref<8x8x32xf32, #tpu.memory_space<vmem>>, vector<1x8x32xf32>
    %2 = vector.shape_cast %1 : vector<1x8x32xf32> to vector<8x32xf32>
    %c0_4 = arith.constant 0 : index
    %c0_5 = arith.constant 0 : index
    %3 = vector.load %arg1[%c0_4, %c0_5] : memref<32x256xf32, #tpu.memory_space<vmem>>, vector<32x256xf32>
    %cst = arith.constant dense<0.000000e+00> : vector<8x256xf32>
    %4 = tpu.matmul %2, %3, %cst {dimension_numbers = #tpu.dot_dimension_numbers<[1], [0], [0], [1], [0, 0, 1, 1], [], []>} : vector<8x32xf32>, vector<32x256xf32>, vector<8x256xf32> -> vector<8x256xf32>
    %c1 = arith.constant 1 : index
    %c0_6 = arith.constant 0 : index
    %c0_7 = arith.constant 0 : index
    %5 = vector.load %arg0[%c1, %c0_6, %c0_7] : memref<8x8x32xf32, #tpu.memory_space<vmem>>, vector<1x8x32xf32>
    %6 = vector.shape_cast %5 : vector<1x8x32xf32> to vector<8x32xf32>
    %c0_8 = arith.constant 0 : index
    %c0_9 = arith.constant 0 : index
    %7 = vector.load %arg1[%c0_8, %c0_9] : memref<32x256xf32, #tpu.memory_space<vmem>>, vector<32x256xf32>
    %cst_10 = arith.constant dense<0.000000e+00> : vector<8x256xf32>
    %8 = tpu.matmul %6, %7, %cst_10 {dimension_numbers = #tpu.dot_dimension_numbers<[1], [0], [0], [1], [0, 0, 1, 1], [], []>} : vector<8x32xf32>, vector<32x256xf32>, vector<8x256xf32> -> vector<8x256xf32>
    %c2 = arith.constant 2 : index
    %c0_11 = arith.constant 0 : index
    %c0_12 = arith.constant 0 : index
    %9 = vector.load %arg0[%c2, %c0_11, %c0_12] : memref<8x8x32xf32, #tpu.memory_space<vmem>>, vector<1x8x32xf32>
    %10 = vector.shape_cast %9 : vector<1x8x32xf32> to vector<8x32xf32>
    %c0_13 = arith.constant 0 : index
    %c0_14 = arith.constant 0 : index
    %11 = vector.load %arg1[%c0_13, %c0_14] : memref<32x256xf32, #tpu.memory_space<vmem>>, vector<32x256xf32>
    %cst_15 = arith.constant dense<0.000000e+00> : vector<8x256xf32>
    %12 = tpu.matmul %10, %11, %cst_15 {dimension_numbers = #tpu.dot_dimension_numbers<[1], [0], [0], [1], [0, 0, 1, 1], [], []>} : vector<8x32xf32>, vector<32x256xf32>, vector<8x256xf32> -> vector<8x256xf32>
    %c3 = arith.constant 3 : index
    %c0_16 = arith.constant 0 : index
    %c0_17 = arith.constant 0 : index
    %13 = vector.load %arg0[%c3, %c0_16, %c0_17] : memref<8x8x32xf32, #tpu.memory_space<vmem>>, vector<1x8x32xf32>
    %14 = vector.shape_cast %13 : vector<1x8x32xf32> to vector<8x32xf32>
    %c0_18 = arith.constant 0 : index
    %c0_19 = arith.constant 0 : index
    %15 = vector.load %arg1[%c0_18, %c0_19] : memref<32x256xf32, #tpu.memory_space<vmem>>, vector<32x256xf32>
    %cst_20 = arith.constant dense<0.000000e+00> : vector<8x256xf32>
    %16 = tpu.matmul %14, %15, %cst_20 {dimension_numbers = #tpu.dot_dimension_numbers<[1], [0], [0], [1], [0, 0, 1, 1], [], []>} : vector<8x32xf32>, vector<32x256xf32>, vector<8x256xf32> -> vector<8x256xf32>
    %c4 = arith.constant 4 : index
    %c0_21 = arith.constant 0 : index
    %c0_22 = arith.constant 0 : index
    %17 = vector.load %arg0[%c4, %c0_21, %c0_22] : memref<8x8x32xf32, #tpu.memory_space<vmem>>, vector<1x8x32xf32>
    %18 = vector.shape_cast %17 : vector<1x8x32xf32> to vector<8x32xf32>
    %c0_23 = arith.constant 0 : index
    %c0_24 = arith.constant 0 : index
    %19 = vector.load %arg1[%c0_23, %c0_24] : memref<32x256xf32, #tpu.memory_space<vmem>>, vector<32x256xf32>
    %cst_25 = arith.constant dense<0.000000e+00> : vector<8x256xf32>
    %20 = tpu.matmul %18, %19, %cst_25 {dimension_numbers = #tpu.dot_dimension_numbers<[1], [0], [0], [1], [0, 0, 1, 1], [], []>} : vector<8x32xf32>, vector<32x256xf32>, vector<8x256xf32> -> vector<8x256xf32>
    %c5 = arith.constant 5 : index
    %c0_26 = arith.constant 0 : index
    %c0_27 = arith.constant 0 : index
    %21 = vector.load %arg0[%c5, %c0_26, %c0_27] : memref<8x8x32xf32, #tpu.memory_space<vmem>>, vector<1x8x32xf32>
    %22 = vector.shape_cast %21 : vector<1x8x32xf32> to vector<8x32xf32>
    %c0_28 = arith.constant 0 : index
    %c0_29 = arith.constant 0 : index
    %23 = vector.load %arg1[%c0_28, %c0_29] : memref<32x256xf32, #tpu.memory_space<vmem>>, vector<32x256xf32>
    %cst_30 = arith.constant dense<0.000000e+00> : vector<8x256xf32>
    %24 = tpu.matmul %22, %23, %cst_30 {dimension_numbers = #tpu.dot_dimension_numbers<[1], [0], [0], [1], [0, 0, 1, 1], [], []>} : vector<8x32xf32>, vector<32x256xf32>, vector<8x256xf32> -> vector<8x256xf32>
    %c6 = arith.constant 6 : index
    %c0_31 = arith.constant 0 : index
    %c0_32 = arith.constant 0 : index
    %25 = vector.load %arg0[%c6, %c0_31, %c0_32] : memref<8x8x32xf32, #tpu.memory_space<vmem>>, vector<1x8x32xf32>
    %26 = vector.shape_cast %25 : vector<1x8x32xf32> to vector<8x32xf32>
    %c0_33 = arith.constant 0 : index
    %c0_34 = arith.constant 0 : index
    %27 = vector.load %arg1[%c0_33, %c0_34] : memref<32x256xf32, #tpu.memory_space<vmem>>, vector<32x256xf32>
    %cst_35 = arith.constant dense<0.000000e+00> : vector<8x256xf32>
    %28 = tpu.matmul %26, %27, %cst_35 {dimension_numbers = #tpu.dot_dimension_numbers<[1], [0], [0], [1], [0, 0, 1, 1], [], []>} : vector<8x32xf32>, vector<32x256xf32>, vector<8x256xf32> -> vector<8x256xf32>
    %c7 = arith.constant 7 : index
    %c0_36 = arith.constant 0 : index
    %c0_37 = arith.constant 0 : index
    %29 = vector.load %arg0[%c7, %c0_36, %c0_37] : memref<8x8x32xf32, #tpu.memory_space<vmem>>, vector<1x8x32xf32>
    %30 = vector.shape_cast %29 : vector<1x8x32xf32> to vector<8x32xf32>
    %c0_38 = arith.constant 0 : index
    %c0_39 = arith.constant 0 : index
    %31 = vector.load %arg1[%c0_38, %c0_39] : memref<32x256xf32, #tpu.memory_space<vmem>>, vector<32x256xf32>
    %cst_40 = arith.constant dense<0.000000e+00> : vector<8x256xf32>
    %32 = tpu.matmul %30, %31, %cst_40 {dimension_numbers = #tpu.dot_dimension_numbers<[1], [0], [0], [1], [0, 0, 1, 1], [], []>} : vector<8x32xf32>, vector<32x256xf32>, vector<8x256xf32> -> vector<8x256xf32>
    %c0_41 = arith.constant 0 : index
    %c0_42 = arith.constant 0 : index
    %c0_43 = arith.constant 0 : index
    %33 = vector.load %arg0[%c0_41, %c0_42, %c0_43] : memref<8x8x32xf32, #tpu.memory_space<vmem>>, vector<1x8x32xf32>
    %34 = vector.shape_cast %33 : vector<1x8x32xf32> to vector<8x32xf32>
    %c0_44 = arith.constant 0 : index
    %c0_45 = arith.constant 0 : index
    %35 = vector.load %arg2[%c0_44, %c0_45] : memref<32x256xf32, #tpu.memory_space<vmem>>, vector<32x256xf32>
    %cst_46 = arith.constant dense<0.000000e+00> : vector<8x256xf32>
    %36 = tpu.matmul %34, %35, %cst_46 {dimension_numbers = #tpu.dot_dimension_numbers<[1], [0], [0], [1], [0, 0, 1, 1], [], []>} : vector<8x32xf32>, vector<32x256xf32>, vector<8x256xf32> -> vector<8x256xf32>
    %c1_47 = arith.constant 1 : index
    %c0_48 = arith.constant 0 : index
    %c0_49 = arith.constant 0 : index
    %37 = vector.load %arg0[%c1_47, %c0_48, %c0_49] : memref<8x8x32xf32, #tpu.memory_space<vmem>>, vector<1x8x32xf32>
    %38 = vector.shape_cast %37 : vector<1x8x32xf32> to vector<8x32xf32>
    %c0_50 = arith.constant 0 : index
    %c0_51 = arith.constant 0 : index
    %39 = vector.load %arg2[%c0_50, %c0_51] : memref<32x256xf32, #tpu.memory_space<vmem>>, vector<32x256xf32>
    %cst_52 = arith.constant dense<0.000000e+00> : vector<8x256xf32>
    %40 = tpu.matmul %38, %39, %cst_52 {dimension_numbers = #tpu.dot_dimension_numbers<[1], [0], [0], [1], [0, 0, 1, 1], [], []>} : vector<8x32xf32>, vector<32x256xf32>, vector<8x256xf32> -> vector<8x256xf32>
    %c2_53 = arith.constant 2 : index
    %c0_54 = arith.constant 0 : index
    %c0_55 = arith.constant 0 : index
    %41 = vector.load %arg0[%c2_53, %c0_54, %c0_55] : memref<8x8x32xf32, #tpu.memory_space<vmem>>, vector<1x8x32xf32>
    %42 = vector.shape_cast %41 : vector<1x8x32xf32> to vector<8x32xf32>
    %c0_56 = arith.constant 0 : index
    %c0_57 = arith.constant 0 : index
    %43 = vector.load %arg2[%c0_56, %c0_57] : memref<32x256xf32, #tpu.memory_space<vmem>>, vector<32x256xf32>
    %cst_58 = arith.constant dense<0.000000e+00> : vector<8x256xf32>
    %44 = tpu.matmul %42, %43, %cst_58 {dimension_numbers = #tpu.dot_dimension_numbers<[1], [0], [0], [1], [0, 0, 1, 1], [], []>} : vector<8x32xf32>, vector<32x256xf32>, vector<8x256xf32> -> vector<8x256xf32>
    %c3_59 = arith.constant 3 : index
    %c0_60 = arith.constant 0 : index
    %c0_61 = arith.constant 0 : index
    %45 = vector.load %arg0[%c3_59, %c0_60, %c0_61] : memref<8x8x32xf32, #tpu.memory_space<vmem>>, vector<1x8x32xf32>
    %46 = vector.shape_cast %45 : vector<1x8x32xf32> to vector<8x32xf32>
    %c0_62 = arith.constant 0 : index
    %c0_63 = arith.constant 0 : index
    %47 = vector.load %arg2[%c0_62, %c0_63] : memref<32x256xf32, #tpu.memory_space<vmem>>, vector<32x256xf32>
    %cst_64 = arith.constant dense<0.000000e+00> : vector<8x256xf32>
    %48 = tpu.matmul %46, %47, %cst_64 {dimension_numbers = #tpu.dot_dimension_numbers<[1], [0], [0], [1], [0, 0, 1, 1], [], []>} : vector<8x32xf32>, vector<32x256xf32>, vector<8x256xf32> -> vector<8x256xf32>
    %c4_65 = arith.constant 4 : index
    %c0_66 = arith.constant 0 : index
    %c0_67 = arith.constant 0 : index
    %49 = vector.load %arg0[%c4_65, %c0_66, %c0_67] : memref<8x8x32xf32, #tpu.memory_space<vmem>>, vector<1x8x32xf32>
    %50 = vector.shape_cast %49 : vector<1x8x32xf32> to vector<8x32xf32>
    %c0_68 = arith.constant 0 : index
    %c0_69 = arith.constant 0 : index
    %51 = vector.load %arg2[%c0_68, %c0_69] : memref<32x256xf32, #tpu.memory_space<vmem>>, vector<32x256xf32>
    %cst_70 = arith.constant dense<0.000000e+00> : vector<8x256xf32>
    %52 = tpu.matmul %50, %51, %cst_70 {dimension_numbers = #tpu.dot_dimension_numbers<[1], [0], [0], [1], [0, 0, 1, 1], [], []>} : vector<8x32xf32>, vector<32x256xf32>, vector<8x256xf32> -> vector<8x256xf32>
    %c5_71 = arith.constant 5 : index
    %c0_72 = arith.constant 0 : index
    %c0_73 = arith.constant 0 : index
    %53 = vector.load %arg0[%c5_71, %c0_72, %c0_73] : memref<8x8x32xf32, #tpu.memory_space<vmem>>, vector<1x8x32xf32>
    %54 = vector.shape_cast %53 : vector<1x8x32xf32> to vector<8x32xf32>
    %c0_74 = arith.constant 0 : index
    %c0_75 = arith.constant 0 : index
    %55 = vector.load %arg2[%c0_74, %c0_75] : memref<32x256xf32, #tpu.memory_space<vmem>>, vector<32x256xf32>
    %cst_76 = arith.constant dense<0.000000e+00> : vector<8x256xf32>
    %56 = tpu.matmul %54, %55, %cst_76 {dimension_numbers = #tpu.dot_dimension_numbers<[1], [0], [0], [1], [0, 0, 1, 1], [], []>} : vector<8x32xf32>, vector<32x256xf32>, vector<8x256xf32> -> vector<8x256xf32>
    %c6_77 = arith.constant 6 : index
    %c0_78 = arith.constant 0 : index
    %c0_79 = arith.constant 0 : index
    %57 = vector.load %arg0[%c6_77, %c0_78, %c0_79] : memref<8x8x32xf32, #tpu.memory_space<vmem>>, vector<1x8x32xf32>
    %58 = vector.shape_cast %57 : vector<1x8x32xf32> to vector<8x32xf32>
    %c0_80 = arith.constant 0 : index
    %c0_81 = arith.constant 0 : index
    %59 = vector.load %arg2[%c0_80, %c0_81] : memref<32x256xf32, #tpu.memory_space<vmem>>, vector<32x256xf32>
    %cst_82 = arith.constant dense<0.000000e+00> : vector<8x256xf32>
    %60 = tpu.matmul %58, %59, %cst_82 {dimension_numbers = #tpu.dot_dimension_numbers<[1], [0], [0], [1], [0, 0, 1, 1], [], []>} : vector<8x32xf32>, vector<32x256xf32>, vector<8x256xf32> -> vector<8x256xf32>
    %c7_83 = arith.constant 7 : index
    %c0_84 = arith.constant 0 : index
    %c0_85 = arith.constant 0 : index
    %61 = vector.load %arg0[%c7_83, %c0_84, %c0_85] : memref<8x8x32xf32, #tpu.memory_space<vmem>>, vector<1x8x32xf32>
    %62 = vector.shape_cast %61 : vector<1x8x32xf32> to vector<8x32xf32>
    %c0_86 = arith.constant 0 : index
    %c0_87 = arith.constant 0 : index
    %63 = vector.load %arg2[%c0_86, %c0_87] : memref<32x256xf32, #tpu.memory_space<vmem>>, vector<32x256xf32>
    %cst_88 = arith.constant dense<0.000000e+00> : vector<8x256xf32>
    %64 = tpu.matmul %62, %63, %cst_88 {dimension_numbers = #tpu.dot_dimension_numbers<[1], [0], [0], [1], [0, 0, 1, 1], [], []>} : vector<8x32xf32>, vector<32x256xf32>, vector<8x256xf32> -> vector<8x256xf32>
    %65 = arith.addf %4, %64 : vector<8x256xf32>
    %66 = vector.broadcast %0 : vector<1x256xf32> to vector<8x256xf32>
    %67 = arith.addf %65, %66 : vector<8x256xf32>
    %68 = arith.addf %8, %60 : vector<8x256xf32>
    %69 = vector.broadcast %0 : vector<1x256xf32> to vector<8x256xf32>
    %70 = arith.addf %68, %69 : vector<8x256xf32>
    %71 = arith.addf %12, %56 : vector<8x256xf32>
    %72 = vector.broadcast %0 : vector<1x256xf32> to vector<8x256xf32>
    %73 = arith.addf %71, %72 : vector<8x256xf32>
    %74 = arith.addf %16, %52 : vector<8x256xf32>
    %75 = vector.broadcast %0 : vector<1x256xf32> to vector<8x256xf32>
    %76 = arith.addf %74, %75 : vector<8x256xf32>
    %77 = arith.addf %20, %48 : vector<8x256xf32>
    %78 = vector.broadcast %0 : vector<1x256xf32> to vector<8x256xf32>
    %79 = arith.addf %77, %78 : vector<8x256xf32>
    %80 = arith.addf %24, %44 : vector<8x256xf32>
    %81 = vector.broadcast %0 : vector<1x256xf32> to vector<8x256xf32>
    %82 = arith.addf %80, %81 : vector<8x256xf32>
    %83 = arith.addf %28, %40 : vector<8x256xf32>
    %84 = vector.broadcast %0 : vector<1x256xf32> to vector<8x256xf32>
    %85 = arith.addf %83, %84 : vector<8x256xf32>
    %86 = arith.addf %32, %36 : vector<8x256xf32>
    %87 = vector.broadcast %0 : vector<1x256xf32> to vector<8x256xf32>
    %88 = arith.addf %86, %87 : vector<8x256xf32>
    %c0_89 = arith.constant 0 : index
    %c0_90 = arith.constant 0 : index
    %89 = vector.load %arg4[%c0_89, %c0_90] : memref<64x256xf32, #tpu.memory_space<vmem>>, vector<64x256xf32>
    %cst_91 = arith.constant 0.000000e+00 : f32
    %90 = vector.broadcast %cst_91 : f32 to vector<8x64xf32>
    %cst_92 = arith.constant 0.000000e+00 : f32
    %91 = vector.broadcast %cst_92 : f32 to vector<8x64xf32>
    %cst_93 = arith.constant 0xFF800000 : f32
    %92 = vector.broadcast %cst_93 : f32 to vector<8x64xf32>
    %cst_94 = arith.constant dense<0.000000e+00> : vector<8x256xf32>
    %93 = tpu.matmul %90, %89, %cst_94 {dimension_numbers = #tpu.dot_dimension_numbers<[1], [0], [0], [1], [0, 0, 1, 1], [], []>} : vector<8x64xf32>, vector<64x256xf32>, vector<8x256xf32> -> vector<8x256xf32>
    %94 = arith.addf %67, %93 : vector<8x256xf32>
    %95 = vector.extract_strided_slice %94 {offsets = [0, 0], sizes = [8, 64], strides = [1, 1]} : vector<8x256xf32> to vector<8x64xf32>
    %96 = arith.negf %95 : vector<8x64xf32>
    %97 = math.exp %96 : vector<8x64xf32>
    %cst_95 = arith.constant 1.000000e+00 : f32
    %98 = vector.broadcast %cst_95 : f32 to vector<8x64xf32>
    %99 = arith.addf %98, %97 : vector<8x64xf32>
    %100 = arith.divf %98, %99 : vector<8x64xf32>
    %101 = vector.extract_strided_slice %94 {offsets = [0, 64], sizes = [8, 64], strides = [1, 1]} : vector<8x256xf32> to vector<8x64xf32>
    %102 = arith.negf %101 : vector<8x64xf32>
    %103 = math.exp %102 : vector<8x64xf32>
    %cst_96 = arith.constant 1.000000e+00 : f32
    %104 = vector.broadcast %cst_96 : f32 to vector<8x64xf32>
    %105 = arith.addf %104, %103 : vector<8x64xf32>
    %106 = arith.divf %104, %105 : vector<8x64xf32>
    %107 = vector.extract_strided_slice %94 {offsets = [0, 128], sizes = [8, 64], strides = [1, 1]} : vector<8x256xf32> to vector<8x64xf32>
    %108 = math.tanh %107 : vector<8x64xf32>
    %109 = vector.extract_strided_slice %94 {offsets = [0, 192], sizes = [8, 64], strides = [1, 1]} : vector<8x256xf32> to vector<8x64xf32>
    %110 = arith.negf %109 : vector<8x64xf32>
    %111 = math.exp %110 : vector<8x64xf32>
    %cst_97 = arith.constant 1.000000e+00 : f32
    %112 = vector.broadcast %cst_97 : f32 to vector<8x64xf32>
    %113 = arith.addf %112, %111 : vector<8x64xf32>
    %114 = arith.divf %112, %113 : vector<8x64xf32>
    %115 = arith.mulf %106, %91 : vector<8x64xf32>
    %116 = arith.mulf %100, %108 : vector<8x64xf32>
    %117 = arith.addf %115, %116 : vector<8x64xf32>
    %118 = math.tanh %117 : vector<8x64xf32>
    %119 = arith.mulf %114, %118 : vector<8x64xf32>
    %120 = arith.maximumf %92, %119 : vector<8x64xf32>
    %cst_98 = arith.constant dense<0.000000e+00> : vector<8x256xf32>
    %121 = tpu.matmul %119, %89, %cst_98 {dimension_numbers = #tpu.dot_dimension_numbers<[1], [0], [0], [1], [0, 0, 1, 1], [], []>} : vector<8x64xf32>, vector<64x256xf32>, vector<8x256xf32> -> vector<8x256xf32>
    %122 = arith.addf %70, %121 : vector<8x256xf32>
    %123 = vector.extract_strided_slice %122 {offsets = [0, 0], sizes = [8, 64], strides = [1, 1]} : vector<8x256xf32> to vector<8x64xf32>
    %124 = arith.negf %123 : vector<8x64xf32>
    %125 = math.exp %124 : vector<8x64xf32>
    %cst_99 = arith.constant 1.000000e+00 : f32
    %126 = vector.broadcast %cst_99 : f32 to vector<8x64xf32>
    %127 = arith.addf %126, %125 : vector<8x64xf32>
    %128 = arith.divf %126, %127 : vector<8x64xf32>
    %129 = vector.extract_strided_slice %122 {offsets = [0, 64], sizes = [8, 64], strides = [1, 1]} : vector<8x256xf32> to vector<8x64xf32>
    %130 = arith.negf %129 : vector<8x64xf32>
    %131 = math.exp %130 : vector<8x64xf32>
    %cst_100 = arith.constant 1.000000e+00 : f32
    %132 = vector.broadcast %cst_100 : f32 to vector<8x64xf32>
    %133 = arith.addf %132, %131 : vector<8x64xf32>
    %134 = arith.divf %132, %133 : vector<8x64xf32>
    %135 = vector.extract_strided_slice %122 {offsets = [0, 128], sizes = [8, 64], strides = [1, 1]} : vector<8x256xf32> to vector<8x64xf32>
    %136 = math.tanh %135 : vector<8x64xf32>
    %137 = vector.extract_strided_slice %122 {offsets = [0, 192], sizes = [8, 64], strides = [1, 1]} : vector<8x256xf32> to vector<8x64xf32>
    %138 = arith.negf %137 : vector<8x64xf32>
    %139 = math.exp %138 : vector<8x64xf32>
    %cst_101 = arith.constant 1.000000e+00 : f32
    %140 = vector.broadcast %cst_101 : f32 to vector<8x64xf32>
    %141 = arith.addf %140, %139 : vector<8x64xf32>
    %142 = arith.divf %140, %141 : vector<8x64xf32>
    %143 = arith.mulf %134, %117 : vector<8x64xf32>
    %144 = arith.mulf %128, %136 : vector<8x64xf32>
    %145 = arith.addf %143, %144 : vector<8x64xf32>
    %146 = math.tanh %145 : vector<8x64xf32>
    %147 = arith.mulf %142, %146 : vector<8x64xf32>
    %148 = arith.maximumf %120, %147 : vector<8x64xf32>
    %cst_102 = arith.constant dense<0.000000e+00> : vector<8x256xf32>
    %149 = tpu.matmul %147, %89, %cst_102 {dimension_numbers = #tpu.dot_dimension_numbers<[1], [0], [0], [1], [0, 0, 1, 1], [], []>} : vector<8x64xf32>, vector<64x256xf32>, vector<8x256xf32> -> vector<8x256xf32>
    %150 = arith.addf %73, %149 : vector<8x256xf32>
    %151 = vector.extract_strided_slice %150 {offsets = [0, 0], sizes = [8, 64], strides = [1, 1]} : vector<8x256xf32> to vector<8x64xf32>
    %152 = arith.negf %151 : vector<8x64xf32>
    %153 = math.exp %152 : vector<8x64xf32>
    %cst_103 = arith.constant 1.000000e+00 : f32
    %154 = vector.broadcast %cst_103 : f32 to vector<8x64xf32>
    %155 = arith.addf %154, %153 : vector<8x64xf32>
    %156 = arith.divf %154, %155 : vector<8x64xf32>
    %157 = vector.extract_strided_slice %150 {offsets = [0, 64], sizes = [8, 64], strides = [1, 1]} : vector<8x256xf32> to vector<8x64xf32>
    %158 = arith.negf %157 : vector<8x64xf32>
    %159 = math.exp %158 : vector<8x64xf32>
    %cst_104 = arith.constant 1.000000e+00 : f32
    %160 = vector.broadcast %cst_104 : f32 to vector<8x64xf32>
    %161 = arith.addf %160, %159 : vector<8x64xf32>
    %162 = arith.divf %160, %161 : vector<8x64xf32>
    %163 = vector.extract_strided_slice %150 {offsets = [0, 128], sizes = [8, 64], strides = [1, 1]} : vector<8x256xf32> to vector<8x64xf32>
    %164 = math.tanh %163 : vector<8x64xf32>
    %165 = vector.extract_strided_slice %150 {offsets = [0, 192], sizes = [8, 64], strides = [1, 1]} : vector<8x256xf32> to vector<8x64xf32>
    %166 = arith.negf %165 : vector<8x64xf32>
    %167 = math.exp %166 : vector<8x64xf32>
    %cst_105 = arith.constant 1.000000e+00 : f32
    %168 = vector.broadcast %cst_105 : f32 to vector<8x64xf32>
    %169 = arith.addf %168, %167 : vector<8x64xf32>
    %170 = arith.divf %168, %169 : vector<8x64xf32>
    %171 = arith.mulf %162, %145 : vector<8x64xf32>
    %172 = arith.mulf %156, %164 : vector<8x64xf32>
    %173 = arith.addf %171, %172 : vector<8x64xf32>
    %174 = math.tanh %173 : vector<8x64xf32>
    %175 = arith.mulf %170, %174 : vector<8x64xf32>
    %176 = arith.maximumf %148, %175 : vector<8x64xf32>
    %cst_106 = arith.constant dense<0.000000e+00> : vector<8x256xf32>
    %177 = tpu.matmul %175, %89, %cst_106 {dimension_numbers = #tpu.dot_dimension_numbers<[1], [0], [0], [1], [0, 0, 1, 1], [], []>} : vector<8x64xf32>, vector<64x256xf32>, vector<8x256xf32> -> vector<8x256xf32>
    %178 = arith.addf %76, %177 : vector<8x256xf32>
    %179 = vector.extract_strided_slice %178 {offsets = [0, 0], sizes = [8, 64], strides = [1, 1]} : vector<8x256xf32> to vector<8x64xf32>
    %180 = arith.negf %179 : vector<8x64xf32>
    %181 = math.exp %180 : vector<8x64xf32>
    %cst_107 = arith.constant 1.000000e+00 : f32
    %182 = vector.broadcast %cst_107 : f32 to vector<8x64xf32>
    %183 = arith.addf %182, %181 : vector<8x64xf32>
    %184 = arith.divf %182, %183 : vector<8x64xf32>
    %185 = vector.extract_strided_slice %178 {offsets = [0, 64], sizes = [8, 64], strides = [1, 1]} : vector<8x256xf32> to vector<8x64xf32>
    %186 = arith.negf %185 : vector<8x64xf32>
    %187 = math.exp %186 : vector<8x64xf32>
    %cst_108 = arith.constant 1.000000e+00 : f32
    %188 = vector.broadcast %cst_108 : f32 to vector<8x64xf32>
    %189 = arith.addf %188, %187 : vector<8x64xf32>
    %190 = arith.divf %188, %189 : vector<8x64xf32>
    %191 = vector.extract_strided_slice %178 {offsets = [0, 128], sizes = [8, 64], strides = [1, 1]} : vector<8x256xf32> to vector<8x64xf32>
    %192 = math.tanh %191 : vector<8x64xf32>
    %193 = vector.extract_strided_slice %178 {offsets = [0, 192], sizes = [8, 64], strides = [1, 1]} : vector<8x256xf32> to vector<8x64xf32>
    %194 = arith.negf %193 : vector<8x64xf32>
    %195 = math.exp %194 : vector<8x64xf32>
    %cst_109 = arith.constant 1.000000e+00 : f32
    %196 = vector.broadcast %cst_109 : f32 to vector<8x64xf32>
    %197 = arith.addf %196, %195 : vector<8x64xf32>
    %198 = arith.divf %196, %197 : vector<8x64xf32>
    %199 = arith.mulf %190, %173 : vector<8x64xf32>
    %200 = arith.mulf %184, %192 : vector<8x64xf32>
    %201 = arith.addf %199, %200 : vector<8x64xf32>
    %202 = math.tanh %201 : vector<8x64xf32>
    %203 = arith.mulf %198, %202 : vector<8x64xf32>
    %204 = arith.maximumf %176, %203 : vector<8x64xf32>
    %cst_110 = arith.constant dense<0.000000e+00> : vector<8x256xf32>
    %205 = tpu.matmul %203, %89, %cst_110 {dimension_numbers = #tpu.dot_dimension_numbers<[1], [0], [0], [1], [0, 0, 1, 1], [], []>} : vector<8x64xf32>, vector<64x256xf32>, vector<8x256xf32> -> vector<8x256xf32>
    %206 = arith.addf %79, %205 : vector<8x256xf32>
    %207 = vector.extract_strided_slice %206 {offsets = [0, 0], sizes = [8, 64], strides = [1, 1]} : vector<8x256xf32> to vector<8x64xf32>
    %208 = arith.negf %207 : vector<8x64xf32>
    %209 = math.exp %208 : vector<8x64xf32>
    %cst_111 = arith.constant 1.000000e+00 : f32
    %210 = vector.broadcast %cst_111 : f32 to vector<8x64xf32>
    %211 = arith.addf %210, %209 : vector<8x64xf32>
    %212 = arith.divf %210, %211 : vector<8x64xf32>
    %213 = vector.extract_strided_slice %206 {offsets = [0, 64], sizes = [8, 64], strides = [1, 1]} : vector<8x256xf32> to vector<8x64xf32>
    %214 = arith.negf %213 : vector<8x64xf32>
    %215 = math.exp %214 : vector<8x64xf32>
    %cst_112 = arith.constant 1.000000e+00 : f32
    %216 = vector.broadcast %cst_112 : f32 to vector<8x64xf32>
    %217 = arith.addf %216, %215 : vector<8x64xf32>
    %218 = arith.divf %216, %217 : vector<8x64xf32>
    %219 = vector.extract_strided_slice %206 {offsets = [0, 128], sizes = [8, 64], strides = [1, 1]} : vector<8x256xf32> to vector<8x64xf32>
    %220 = math.tanh %219 : vector<8x64xf32>
    %221 = vector.extract_strided_slice %206 {offsets = [0, 192], sizes = [8, 64], strides = [1, 1]} : vector<8x256xf32> to vector<8x64xf32>
    %222 = arith.negf %221 : vector<8x64xf32>
    %223 = math.exp %222 : vector<8x64xf32>
    %cst_113 = arith.constant 1.000000e+00 : f32
    %224 = vector.broadcast %cst_113 : f32 to vector<8x64xf32>
    %225 = arith.addf %224, %223 : vector<8x64xf32>
    %226 = arith.divf %224, %225 : vector<8x64xf32>
    %227 = arith.mulf %218, %201 : vector<8x64xf32>
    %228 = arith.mulf %212, %220 : vector<8x64xf32>
    %229 = arith.addf %227, %228 : vector<8x64xf32>
    %230 = math.tanh %229 : vector<8x64xf32>
    %231 = arith.mulf %226, %230 : vector<8x64xf32>
    %232 = arith.maximumf %204, %231 : vector<8x64xf32>
    %cst_114 = arith.constant dense<0.000000e+00> : vector<8x256xf32>
    %233 = tpu.matmul %231, %89, %cst_114 {dimension_numbers = #tpu.dot_dimension_numbers<[1], [0], [0], [1], [0, 0, 1, 1], [], []>} : vector<8x64xf32>, vector<64x256xf32>, vector<8x256xf32> -> vector<8x256xf32>
    %234 = arith.addf %82, %233 : vector<8x256xf32>
    %235 = vector.extract_strided_slice %234 {offsets = [0, 0], sizes = [8, 64], strides = [1, 1]} : vector<8x256xf32> to vector<8x64xf32>
    %236 = arith.negf %235 : vector<8x64xf32>
    %237 = math.exp %236 : vector<8x64xf32>
    %cst_115 = arith.constant 1.000000e+00 : f32
    %238 = vector.broadcast %cst_115 : f32 to vector<8x64xf32>
    %239 = arith.addf %238, %237 : vector<8x64xf32>
    %240 = arith.divf %238, %239 : vector<8x64xf32>
    %241 = vector.extract_strided_slice %234 {offsets = [0, 64], sizes = [8, 64], strides = [1, 1]} : vector<8x256xf32> to vector<8x64xf32>
    %242 = arith.negf %241 : vector<8x64xf32>
    %243 = math.exp %242 : vector<8x64xf32>
    %cst_116 = arith.constant 1.000000e+00 : f32
    %244 = vector.broadcast %cst_116 : f32 to vector<8x64xf32>
    %245 = arith.addf %244, %243 : vector<8x64xf32>
    %246 = arith.divf %244, %245 : vector<8x64xf32>
    %247 = vector.extract_strided_slice %234 {offsets = [0, 128], sizes = [8, 64], strides = [1, 1]} : vector<8x256xf32> to vector<8x64xf32>
    %248 = math.tanh %247 : vector<8x64xf32>
    %249 = vector.extract_strided_slice %234 {offsets = [0, 192], sizes = [8, 64], strides = [1, 1]} : vector<8x256xf32> to vector<8x64xf32>
    %250 = arith.negf %249 : vector<8x64xf32>
    %251 = math.exp %250 : vector<8x64xf32>
    %cst_117 = arith.constant 1.000000e+00 : f32
    %252 = vector.broadcast %cst_117 : f32 to vector<8x64xf32>
    %253 = arith.addf %252, %251 : vector<8x64xf32>
    %254 = arith.divf %252, %253 : vector<8x64xf32>
    %255 = arith.mulf %246, %229 : vector<8x64xf32>
    %256 = arith.mulf %240, %248 : vector<8x64xf32>
    %257 = arith.addf %255, %256 : vector<8x64xf32>
    %258 = math.tanh %257 : vector<8x64xf32>
    %259 = arith.mulf %254, %258 : vector<8x64xf32>
    %260 = arith.maximumf %232, %259 : vector<8x64xf32>
    %cst_118 = arith.constant dense<0.000000e+00> : vector<8x256xf32>
    %261 = tpu.matmul %259, %89, %cst_118 {dimension_numbers = #tpu.dot_dimension_numbers<[1], [0], [0], [1], [0, 0, 1, 1], [], []>} : vector<8x64xf32>, vector<64x256xf32>, vector<8x256xf32> -> vector<8x256xf32>
    %262 = arith.addf %85, %261 : vector<8x256xf32>
    %263 = vector.extract_strided_slice %262 {offsets = [0, 0], sizes = [8, 64], strides = [1, 1]} : vector<8x256xf32> to vector<8x64xf32>
    %264 = arith.negf %263 : vector<8x64xf32>
    %265 = math.exp %264 : vector<8x64xf32>
    %cst_119 = arith.constant 1.000000e+00 : f32
    %266 = vector.broadcast %cst_119 : f32 to vector<8x64xf32>
    %267 = arith.addf %266, %265 : vector<8x64xf32>
    %268 = arith.divf %266, %267 : vector<8x64xf32>
    %269 = vector.extract_strided_slice %262 {offsets = [0, 64], sizes = [8, 64], strides = [1, 1]} : vector<8x256xf32> to vector<8x64xf32>
    %270 = arith.negf %269 : vector<8x64xf32>
    %271 = math.exp %270 : vector<8x64xf32>
    %cst_120 = arith.constant 1.000000e+00 : f32
    %272 = vector.broadcast %cst_120 : f32 to vector<8x64xf32>
    %273 = arith.addf %272, %271 : vector<8x64xf32>
    %274 = arith.divf %272, %273 : vector<8x64xf32>
    %275 = vector.extract_strided_slice %262 {offsets = [0, 128], sizes = [8, 64], strides = [1, 1]} : vector<8x256xf32> to vector<8x64xf32>
    %276 = math.tanh %275 : vector<8x64xf32>
    %277 = vector.extract_strided_slice %262 {offsets = [0, 192], sizes = [8, 64], strides = [1, 1]} : vector<8x256xf32> to vector<8x64xf32>
    %278 = arith.negf %277 : vector<8x64xf32>
    %279 = math.exp %278 : vector<8x64xf32>
    %cst_121 = arith.constant 1.000000e+00 : f32
    %280 = vector.broadcast %cst_121 : f32 to vector<8x64xf32>
    %281 = arith.addf %280, %279 : vector<8x64xf32>
    %282 = arith.divf %280, %281 : vector<8x64xf32>
    %283 = arith.mulf %274, %257 : vector<8x64xf32>
    %284 = arith.mulf %268, %276 : vector<8x64xf32>
    %285 = arith.addf %283, %284 : vector<8x64xf32>
    %286 = math.tanh %285 : vector<8x64xf32>
    %287 = arith.mulf %282, %286 : vector<8x64xf32>
    %288 = arith.maximumf %260, %287 : vector<8x64xf32>
    %cst_122 = arith.constant dense<0.000000e+00> : vector<8x256xf32>
    %289 = tpu.matmul %287, %89, %cst_122 {dimension_numbers = #tpu.dot_dimension_numbers<[1], [0], [0], [1], [0, 0, 1, 1], [], []>} : vector<8x64xf32>, vector<64x256xf32>, vector<8x256xf32> -> vector<8x256xf32>
    %290 = arith.addf %88, %289 : vector<8x256xf32>
    %291 = vector.extract_strided_slice %290 {offsets = [0, 0], sizes = [8, 64], strides = [1, 1]} : vector<8x256xf32> to vector<8x64xf32>
    %292 = arith.negf %291 : vector<8x64xf32>
    %293 = math.exp %292 : vector<8x64xf32>
    %cst_123 = arith.constant 1.000000e+00 : f32
    %294 = vector.broadcast %cst_123 : f32 to vector<8x64xf32>
    %295 = arith.addf %294, %293 : vector<8x64xf32>
    %296 = arith.divf %294, %295 : vector<8x64xf32>
    %297 = vector.extract_strided_slice %290 {offsets = [0, 64], sizes = [8, 64], strides = [1, 1]} : vector<8x256xf32> to vector<8x64xf32>
    %298 = arith.negf %297 : vector<8x64xf32>
    %299 = math.exp %298 : vector<8x64xf32>
    %cst_124 = arith.constant 1.000000e+00 : f32
    %300 = vector.broadcast %cst_124 : f32 to vector<8x64xf32>
    %301 = arith.addf %300, %299 : vector<8x64xf32>
    %302 = arith.divf %300, %301 : vector<8x64xf32>
    %303 = vector.extract_strided_slice %290 {offsets = [0, 128], sizes = [8, 64], strides = [1, 1]} : vector<8x256xf32> to vector<8x64xf32>
    %304 = math.tanh %303 : vector<8x64xf32>
    %305 = vector.extract_strided_slice %290 {offsets = [0, 192], sizes = [8, 64], strides = [1, 1]} : vector<8x256xf32> to vector<8x64xf32>
    %306 = arith.negf %305 : vector<8x64xf32>
    %307 = math.exp %306 : vector<8x64xf32>
    %cst_125 = arith.constant 1.000000e+00 : f32
    %308 = vector.broadcast %cst_125 : f32 to vector<8x64xf32>
    %309 = arith.addf %308, %307 : vector<8x64xf32>
    %310 = arith.divf %308, %309 : vector<8x64xf32>
    %311 = arith.mulf %302, %285 : vector<8x64xf32>
    %312 = arith.mulf %296, %304 : vector<8x64xf32>
    %313 = arith.addf %311, %312 : vector<8x64xf32>
    %314 = math.tanh %313 : vector<8x64xf32>
    %315 = arith.mulf %310, %314 : vector<8x64xf32>
    %316 = arith.maximumf %288, %315 : vector<8x64xf32>
    %c0_126 = arith.constant 0 : index
    %c0_127 = arith.constant 0 : index
    %317 = vector.load %arg5[%c0_126, %c0_127] : memref<64x64xf32, #tpu.memory_space<vmem>>, vector<64x64xf32>
    %cst_128 = arith.constant dense<0.000000e+00> : vector<8x64xf32>
    %318 = tpu.matmul %316, %317, %cst_128 {dimension_numbers = #tpu.dot_dimension_numbers<[1], [0], [0], [1], [0, 0, 1, 1], [], []>} : vector<8x64xf32>, vector<64x64xf32>, vector<8x64xf32> -> vector<8x64xf32>
    %c0_129 = arith.constant 0 : index
    %c0_130 = arith.constant 0 : index
    %319 = vector.load %arg6[%c0_129, %c0_130] : memref<1x64xf32, #tpu.memory_space<vmem>>, vector<1x64xf32>
    %320 = vector.broadcast %319 : vector<1x64xf32> to vector<8x64xf32>
    %321 = arith.addf %318, %320 : vector<8x64xf32>
    %322 = math.tanh %321 : vector<8x64xf32>
    %c0_131 = arith.constant 0 : index
    %c0_132 = arith.constant 0 : index
    %323 = vector.load %arg7[%c0_131, %c0_132] : memref<64x64xf32, #tpu.memory_space<vmem>>, vector<64x64xf32>
    %cst_133 = arith.constant dense<0.000000e+00> : vector<8x64xf32>
    %324 = tpu.matmul %322, %323, %cst_133 {dimension_numbers = #tpu.dot_dimension_numbers<[1], [0], [0], [1], [0, 0, 1, 1], [], []>} : vector<8x64xf32>, vector<64x64xf32>, vector<8x64xf32> -> vector<8x64xf32>
    %c0_134 = arith.constant 0 : index
    %c0_135 = arith.constant 0 : index
    %325 = vector.load %arg8[%c0_134, %c0_135] : memref<1x64xf32, #tpu.memory_space<vmem>>, vector<1x64xf32>
    %326 = vector.broadcast %325 : vector<1x64xf32> to vector<8x64xf32>
    %327 = arith.addf %324, %326 : vector<8x64xf32>
    %328 = math.tanh %327 : vector<8x64xf32>
    %c0_136 = arith.constant 0 : index
    %c0_137 = arith.constant 0 : index
    %329 = vector.load %arg9[%c0_136, %c0_137] : memref<64x128xf32, #tpu.memory_space<vmem>>, vector<64x128xf32>
    %cst_138 = arith.constant dense<0.000000e+00> : vector<8x128xf32>
    %330 = tpu.matmul %328, %329, %cst_138 {dimension_numbers = #tpu.dot_dimension_numbers<[1], [0], [0], [1], [0, 0, 1, 1], [], []>} : vector<8x64xf32>, vector<64x128xf32>, vector<8x128xf32> -> vector<8x128xf32>
    %c0_139 = arith.constant 0 : index
    %c0_140 = arith.constant 0 : index
    %331 = vector.load %arg10[%c0_139, %c0_140] : memref<1x128xf32, #tpu.memory_space<vmem>>, vector<1x128xf32>
    %332 = vector.broadcast %331 : vector<1x128xf32> to vector<8x128xf32>
    %333 = arith.addf %330, %332 : vector<8x128xf32>
    %c0_141 = arith.constant 0 : index
    %c0_142 = arith.constant 0 : index
    %334 = vector.load %arg11[%c0_141, %c0_142] : memref<8x128xf32, #tpu.memory_space<vmem>>, vector<8x128xf32>
    tpu.vector_store %arg11[%c0_141, %c0_142], %333 {strides = array<i32>} : memref<8x128xf32, #tpu.memory_space<vmem>>, vector<8x128xf32>,
    return
  }
}

</mosaic_0001>

<llo_original>
// kernel: tpu_custom_call.1
$region0: #{tpu_custom_call.1}
  #allocation0 [shape = 'u32[]', space=smem, size = 0x4, offset = 0x4, fixed_abs, tag = 'smem constant byte address 0x4 - core index']
  #allocation1 [shape = 'u32[144,128]{1,0:T(1,128)}', space=vmem, size = 0x12000, scoped, tag = 'internal scratch']
  %s0 = inlined_call_operand.hbm [shape: f32[8,8,32], index: 0, kind: input, shape index: {}]
  %s1 = inlined_call_operand.hbm [shape: f32[32,256], index: 1, kind: input, shape index: {}]
  %s2 = inlined_call_operand.hbm [shape: f32[32,256], index: 2, kind: input, shape index: {}]
  %s3 = inlined_call_operand.vmem [shape: f32[1,256], index: 3, kind: input, shape index: {}]
  %s4 = inlined_call_operand.hbm [shape: f32[64,256], index: 4, kind: input, shape index: {}]
  %s5 = inlined_call_operand.hbm [shape: f32[64,64], index: 5, kind: input, shape index: {}]
  %s6 = inlined_call_operand.vmem [shape: f32[1,64], index: 6, kind: input, shape index: {}]
  %s7 = inlined_call_operand.hbm [shape: f32[64,64], index: 7, kind: input, shape index: {}]
  %s8 = inlined_call_operand.vmem [shape: f32[1,64], index: 8, kind: input, shape index: {}]
  %s9 = inlined_call_operand.hbm [shape: f32[64,128], index: 9, kind: input, shape index: {}]
  %s10 = inlined_call_operand.vmem [shape: f32[1,128], index: 10, kind: input, shape index: {}]
  %s11 = inlined_call_operand.hbm [shape: f32[8,128], index: 11, kind: output, shape index: {}]
  %s12 = sld [smem:[#allocation0]]
  $region82: #{tpu_custom_call.1} parent=0
    _
  %s14 = ssub.s32 1, %s12
  %s15 = scalar_select 0, %s14, %s12
  $region1: #{tpu_custom_call.1} parent=0
    #allocation2 [shape = 'u8[32768]{0}', space=vmem, size = 0x8000, scoped, tag = 'input window, operand 0, single buffered']
    #allocation3 [shape = 's32[1]{0}', space=sflag, size = 0x4, scoped, tag = 'scoped memory for tpu_custom_call.1']
    #allocation4 [shape = 's32[1]{0}', space=sflag, size = 0x4, scoped, tag = 'scoped memory for tpu_custom_call.1']
    #allocation5 [shape = 'u8[32768]{0}', space=vmem, size = 0x8000, scoped, tag = 'input window, operand 1, single buffered']
    #allocation6 [shape = 's32[1]{0}', space=sflag, size = 0x4, scoped, tag = 'scoped memory for tpu_custom_call.1']
    #allocation7 [shape = 'u8[32768]{0}', space=vmem, size = 0x8000, scoped, tag = 'input window, operand 2, single buffered']
    #allocation8 [shape = 'u8[65536]{0}', space=vmem, size = 0x10000, scoped, tag = 'input window, operand 4, single buffered']
    #allocation9 [shape = 's32[1]{0}', space=sflag, size = 0x4, scoped, tag = 'scoped memory for tpu_custom_call.1']
    #allocation10 [shape = 'u8[32768]{0}', space=vmem, size = 0x8000, scoped, tag = 'input window, operand 5, single buffered']
    #allocation11 [shape = 'u8[32768]{0}', space=vmem, size = 0x8000, scoped, tag = 'input window, operand 7, single buffered']
    #allocation12 [shape = 's32[1]{0}', space=sflag, size = 0x4, scoped, tag = 'scoped memory for tpu_custom_call.1']
    #allocation13 [shape = 'u8[32768]{0}', space=vmem, size = 0x8000, scoped, tag = 'input window, operand 9, single buffered']
    #allocation14 [shape = 'u8[4096]{0}', space=vmem, size = 0x1000, scoped, tag = 'output window, operand 0, single buffered']
    %16 = vsyncpa [#allocation3], 0
    %17 = vsyncpa [#allocation6], 0
    %18 = vsyncpa [#allocation9], 0
    %19 = vsyncpa [#allocation12], 0
    %20 = vsyncpa [#allocation4], 0
    // Predicated region
    $region2: #{tpu_custom_call.1} parent=1 // pred_check
      _
    $region3: #{tpu_custom_call.1} parent=1 // pred_check_branch
      %22 = sbr.rel (0) target = $region5
    $region4: #{tpu_custom_call.1} parent=1 // pred_region
      %s24 = ssub.s32 1024, 1024
      %25 = vsyncadd [#allocation3], %s24
      %s26 = sshll.u32 [#allocation2], 4
      %s27 = int_to_ptr.vmem [resolvable:$true] %s26
      %32 = dma.hbm_to_vmem [thread:$0]  %s0, 1024, %s27, [#allocation3], 128, 128, 8
    $region5: #{tpu_custom_call.1} parent=1 // pred_fallthru
      _
    // Predicated region
    $region6: #{tpu_custom_call.1} parent=1 // pred_check
      _
    $region7: #{tpu_custom_call.1} parent=1 // pred_check_branch
      %34 = sbr.rel (0) target = $region9
    $region8: #{tpu_custom_call.1} parent=1 // pred_region
      %s36 = ssub.s32 1024, 1024
      %37 = vsyncadd [#allocation6], %s36
      %s38 = sshll.u32 [#allocation5], 4
      %s39 = int_to_ptr.vmem [resolvable:$true] %s38
      %44 = dma.hbm_to_vmem [thread:$0]  %s1, 1024, %s39, [#allocation6], 256, 256, 16
    $region9: #{tpu_custom_call.1} parent=1 // pred_fallthru
      _
    // Predicated region
    $region10: #{tpu_custom_call.1} parent=1 // pred_check
      _
    $region11: #{tpu_custom_call.1} parent=1 // pred_check_branch
      %46 = sbr.rel (0) target = $region13
    $region12: #{tpu_custom_call.1} parent=1 // pred_region
      %s48 = ssub.s32 1024, 1024
      %49 = vsyncadd [#allocation6], %s48
      %s50 = sshll.u32 [#allocation7], 4
      %s51 = int_to_ptr.vmem [resolvable:$true] %s50
      %56 = dma.hbm_to_vmem [thread:$0]  %s2, 1024, %s51, [#allocation6], 256, 256, 16
    $region13: #{tpu_custom_call.1} parent=1 // pred_fallthru
      _
    // Predicated region
    $region14: #{tpu_custom_call.1} parent=1 // pred_check
      _
    $region15: #{tpu_custom_call.1} parent=1 // pred_check_branch
      %58 = sbr.rel (0) target = $region17
    $region16: #{tpu_custom_call.1} parent=1 // pred_region
      _
    $region17: #{tpu_custom_call.1} parent=1 // pred_fallthru
      _
    // Predicated region
    $region18: #{tpu_custom_call.1} parent=1 // pred_check
      _
    $region19: #{tpu_custom_call.1} parent=1 // pred_check_branch
      %60 = sbr.rel (0) target = $region21
    $region20: #{tpu_custom_call.1} parent=1 // pred_region
      %s62 = ssub.s32 2048, 2048
      %63 = vsyncadd [#allocation9], %s62
      %s64 = sshll.u32 [#allocation8], 4
      %s65 = int_to_ptr.vmem [resolvable:$true] %s64
      %70 = dma.hbm_to_vmem [thread:$0]  %s4, 2048, %s65, [#allocation9], 256, 256, 16
    $region21: #{tpu_custom_call.1} parent=1 // pred_fallthru
      _
    // Predicated region
    $region22: #{tpu_custom_call.1} parent=1 // pred_check
      _
    $region23: #{tpu_custom_call.1} parent=1 // pred_check_branch
      %72 = sbr.rel (0) target = $region25
    $region24: #{tpu_custom_call.1} parent=1 // pred_region
      %s74 = ssub.s32 1024, 1024
      %75 = vsyncadd [#allocation9], %s74
      %s76 = sshll.u32 [#allocation10], 4
      %s77 = int_to_ptr.vmem [resolvable:$true] %s76
      %82 = dma.hbm_to_vmem [thread:$0]  %s5, 1024, %s77, [#allocation9], 128, 128, 8
    $region25: #{tpu_custom_call.1} parent=1 // pred_fallthru
      _
    // Predicated region
    $region26: #{tpu_custom_call.1} parent=1 // pred_check
      _
    $region27: #{tpu_custom_call.1} parent=1 // pred_check_branch
      %84 = sbr.rel (0) target = $region29
    $region28: #{tpu_custom_call.1} parent=1 // pred_region
      _
    $region29: #{tpu_custom_call.1} parent=1 // pred_fallthru
      _
    // Predicated region
    $region30: #{tpu_custom_call.1} parent=1 // pred_check
      _
    $region31: #{tpu_custom_call.1} parent=1 // pred_check_branch
      %86 = sbr.rel (0) target = $region33
    $region32: #{tpu_custom_call.1} parent=1 // pred_region
      %s88 = ssub.s32 1024, 1024
      %89 = vsyncadd [#allocation12], %s88
      %s90 = sshll.u32 [#allocation11], 4
      %s91 = int_to_ptr.vmem [resolvable:$true] %s90
      %96 = dma.hbm_to_vmem [thread:$0]  %s7, 1024, %s91, [#allocation12], 128, 128, 8
    $region33: #{tpu_custom_call.1} parent=1 // pred_fallthru
      _
    // Predicated region
    $region34: #{tpu_custom_call.1} parent=1 // pred_check
      _
    $region35: #{tpu_custom_call.1} parent=1 // pred_check_branch
      %98 = sbr.rel (0) target = $region37
    $region36: #{tpu_custom_call.1} parent=1 // pred_region
      _
    $region37: #{tpu_custom_call.1} parent=1 // pred_fallthru
      _
    // Predicated region
    $region38: #{tpu_custom_call.1} parent=1 // pred_check
      _
    $region39: #{tpu_custom_call.1} parent=1 // pred_check_branch
      %100 = sbr.rel (0) target = $region41
    $region40: #{tpu_custom_call.1} parent=1 // pred_region
      %s102 = ssub.s32 1024, 1024
      %103 = vsyncadd [#allocation12], %s102
      %s104 = sshll.u32 [#allocation13], 4
      %s105 = int_to_ptr.vmem [resolvable:$true] %s104
      %110 = dma.hbm_to_vmem [thread:$0]  %s9, 1024, %s105, [#allocation12], 128, 128, 8
    $region41: #{tpu_custom_call.1} parent=1 // pred_fallthru
      _
    // Predicated region
    $region42: #{tpu_custom_call.1} parent=1 // pred_check
      _
    $region43: #{tpu_custom_call.1} parent=1 // pred_check_branch
      %112 = sbr.rel (0) target = $region45
    $region44: #{tpu_custom_call.1} parent=1 // pred_region
      _
    $region45: #{tpu_custom_call.1} parent=1 // pred_fallthru
      _
    // Predicated region
    $region46: #{tpu_custom_call.1} parent=1 // pred_check
      _
    $region47: #{tpu_custom_call.1} parent=1 // pred_check_branch
      %114 = sbr.rel (0) target = $region49
    $region48: #{tpu_custom_call.1} parent=1 // pred_region
      %115 = dma.done [#allocation3], 1024
    $region49: #{tpu_custom_call.1} parent=1 // pred_fallthru
      _
    // Predicated region
    $region50: #{tpu_custom_call.1} parent=1 // pred_check
      _
    $region51: #{tpu_custom_call.1} parent=1 // pred_check_branch
      %117 = sbr.rel (0) target = $region53
    $region52: #{tpu_custom_call.1} parent=1 // pred_region
      %118 = dma.done [#allocation6], 1024
    $region53: #{tpu_custom_call.1} parent=1 // pred_fallthru
      _
    // Predicated region
    $region54: #{tpu_custom_call.1} parent=1 // pred_check
      _
    $region55: #{tpu_custom_call.1} parent=1 // pred_check_branch
      %120 = sbr.rel (0) target = $region57
    $region56: #{tpu_custom_call.1} parent=1 // pred_region
      %121 = dma.done [#allocation6], 1024
    $region57: #{tpu_custom_call.1} parent=1 // pred_fallthru
      _
    // Predicated region
    $region58: #{tpu_custom_call.1} parent=1 // pred_check
      _
    $region59: #{tpu_custom_call.1} parent=1 // pred_check_branch
      %123 = sbr.rel (0) target = $region61
    $region60: #{tpu_custom_call.1} parent=1 // pred_region
      %124 = dma.done [#allocation9], 2048
    $region61: #{tpu_custom_call.1} parent=1 // pred_fallthru
      _
    // Predicated region
    $region62: #{tpu_custom_call.1} parent=1 // pred_check
      _
    $region63: #{tpu_custom_call.1} parent=1 // pred_check_branch
      %126 = sbr.rel (0) target = $region65
    $region64: #{tpu_custom_call.1} parent=1 // pred_region
      %127 = dma.done [#allocation9], 1024
    $region65: #{tpu_custom_call.1} parent=1 // pred_fallthru
      _
    // Predicated region
    $region66: #{tpu_custom_call.1} parent=1 // pred_check
      _
    $region67: #{tpu_custom_call.1} parent=1 // pred_check_branch
      %129 = sbr.rel (0) target = $region69
    $region68: #{tpu_custom_call.1} parent=1 // pred_region
      %130 = dma.done [#allocation12], 1024
    $region69: #{tpu_custom_call.1} parent=1 // pred_fallthru
      _
    // Predicated region
    $region70: #{tpu_custom_call.1} parent=1 // pred_check
      _
    $region71: #{tpu_custom_call.1} parent=1 // pred_check_branch
      %132 = sbr.rel (0) target = $region73
    $region72: #{tpu_custom_call.1} parent=1 // pred_region
      %133 = dma.done [#allocation12], 1024
    $region73: #{tpu_custom_call.1} parent=1 // pred_fallthru
      _
    %v134 = vld [vmem:[%s3] sm:$0x3]
    %v135 = vld [vmem:[#allocation2] sm:$0xff]
    %v136 = vld [vmem:[#allocation5] sm:$0xff]
    %v137 = vld [vmem:[#allocation5 + $0x8] sm:$0xff]
    %v138 = vld [vmem:[#allocation5 + $0x10] sm:$0xff]
    %v139 = vld [vmem:[#allocation5 + $0x18] sm:$0xff]
    %v140 = vld [vmem:[#allocation5 + $0x20] sm:$0xff]
    %v141 = vld [vmem:[#allocation5 + $0x28] sm:$0xff]
    %v142 = vld [vmem:[#allocation5 + $0x30] sm:$0xff]
    %v143 = vld [vmem:[#allocation5 + $0x38] sm:$0xff]
    %s144 = scalar_lea.vmem [#allocation2], 8
    %v145 = vld [vmem:[%s144] sm:$0xff]
    %s146 = scalar_lea.vmem [#allocation2], 16
    %v147 = vld [vmem:[%s146] sm:$0xff]
    %s148 = scalar_lea.vmem [#allocation2], 24
    %v149 = vld [vmem:[%s148] sm:$0xff]
    %s150 = scalar_lea.vmem [#allocation2], 32
    %v151 = vld [vmem:[%s150] sm:$0xff]
    %s152 = scalar_lea.vmem [#allocation2], 40
    %v153 = vld [vmem:[%s152] sm:$0xff]
    %s154 = scalar_lea.vmem [#allocation2], 48
    %v155 = vld [vmem:[%s154] sm:$0xff]
    %s156 = scalar_lea.vmem [#allocation2], 56
    %v157 = vld [vmem:[%s156] sm:$0xff]
    %v158 = vld [vmem:[#allocation7] sm:$0xff]
    %v159 = vld [vmem:[#allocation7 + $0x8] sm:$0xff]
    %v160 = vld [vmem:[#allocation7 + $0x10] sm:$0xff]
    %v161 = vld [vmem:[#allocation7 + $0x18] sm:$0xff]
    %v162 = vld [vmem:[#allocation7 + $0x20] sm:$0xff]
    %v163 = vld [vmem:[#allocation7 + $0x28] sm:$0xff]
    %v164 = vld [vmem:[#allocation7 + $0x30] sm:$0xff]
    %v165 = vld [vmem:[#allocation7 + $0x38] sm:$0xff]
    %vm166 = vcmask 261120
    %v168 = vsel %vm166, %v135, 0
    %170 = vmatprep.subr.mxu0 0.0
    %171 = vmatpush1.msra.mxu0 0.0
    %172 = vmatprep.subr.mxu0 0.0
    %173 = vmatpush1.msra.mxu0 0.0
    %174 = vmatprep.subr.mxu0 0.0
    %175 = vmatpush1.msra.mxu0 0.0
    %176 = vmatprep.subr.mxu0 0.0
    %177 = vmatpush1.msra.mxu0 0.0
    %178 = vmatprep.subr.mxu0 0.0
    %179 = vmatpush1.msra.mxu0 0.0
    %180 = vmatprep.subr.mxu0 0.0
    %181 = vmatpush1.msra.mxu0 0.0
    %182 = vmatprep.subr.mxu0 0.0
    %183 = vmatpush1.msra.mxu0 0.0
    %184 = vmatprep.subr.mxu0 0.0
    %185 = vmatpush1.msra.mxu0 0.0
    %186 = vmatprep.subr.mxu0 0.0
    %187 = vmatpush1.msra.mxu0 0.0
    %188 = vmatprep.subr.mxu0 0.0
    %189 = vmatpush1.msra.mxu0 0.0
    %190 = vmatprep.subr.mxu0 0.0
    %191 = vmatpush1.msra.mxu0 0.0
    %192 = vmatprep.subr.mxu0 0.0
    %193 = vmatpush1.msra.mxu0 0.0
    %194 = vmatprep.subr.mxu0 %v165
    %195 = vmatpush1.msra.mxu0 %v164
    %196 = vmatprep.subr.mxu0 %v163
    %197 = vmatpush1.msra.mxu0 %v162
    %198 = vmatprep.subr.mxu0 %v161
    %199 = vmatpush1.msra.mxu0 %v160
    %200 = vmatprep.subr.mxu0 %v159
    %201 = vmatpush1.msra.mxu0 %v158
    %202 = vmatprep.subr.mxu0 0.0
    %203 = vmatpush2.msra.mxu0 0.0
    %204 = vmatprep.subr.mxu0 0.0
    %205 = vmatpush2.msra.mxu0 0.0
    %206 = vmatprep.subr.mxu0 0.0
    %207 = vmatpush2.msra.mxu0 0.0
    %208 = vmatprep.subr.mxu0 0.0
    %209 = vmatpush2.msra.mxu0 0.0
    %210 = vmatprep.subr.mxu0 0.0
    %211 = vmatpush2.msra.mxu0 0.0
    %212 = vmatprep.subr.mxu0 0.0
    %213 = vmatpush2.msra.mxu0 0.0
    %214 = vmatprep.subr.mxu0 0.0
    %215 = vmatpush2.msra.mxu0 0.0
    %216 = vmatprep.subr.mxu0 0.0
    %217 = vmatpush2.msra.mxu0 0.0
    %218 = vmatprep.subr.mxu0 0.0
    %219 = vmatpush2.msra.mxu0 0.0
    %220 = vmatprep.subr.mxu0 0.0
    %221 = vmatpush2.msra.mxu0 0.0
    %222 = vmatprep.subr.mxu0 0.0
    %223 = vmatpush2.msra.mxu0 0.0
    %224 = vmatprep.subr.mxu0 0.0
    %225 = vmatpush2.msra.mxu0 0.0
    %226 = vmatprep.subr.mxu0 0.0
    %227 = vmatpush2.msra.mxu0 0.0
    %228 = vmatprep.subr.mxu0 0.0
    %229 = vmatpush2.msra.mxu0 0.0
    %230 = vmatprep.subr.mxu0 0.0
    %231 = vmatpush2.msra.mxu0 0.0
    %232 = vmatprep.subr.mxu0 0.0
    %233 = vmatpush2.msra.mxu0 0.0
    %234 = vmatprep.mubr.f32.mxu0 0.0
    %235 = vmatmul.mubr.f32.gmra.mxu0 %v168
    %v236 = vpop.f32.mrf.mxu0
    %v237 = vadd.f32 0.0, %v236
    %v238 = vpop.f32.mrf.mxu0
    %v239 = vadd.f32 0.0, %v238
    %240 = vdwg.mxu0
    %v242 = vsel %vm166, %v145, 0
    %244 = vmatprep.subr.mxu0 0.0
    %245 = vmatpush1.msra.mxu0 0.0
    %246 = vmatprep.subr.mxu0 0.0
    %247 = vmatpush1.msra.mxu0 0.0
    %248 = vmatprep.subr.mxu0 0.0
    %249 = vmatpush1.msra.mxu0 0.0
    %250 = vmatprep.subr.mxu0 0.0
    %251 = vmatpush1.msra.mxu0 0.0
    %252 = vmatprep.subr.mxu0 0.0
    %253 = vmatpush1.msra.mxu0 0.0
    %254 = vmatprep.subr.mxu0 0.0
    %255 = vmatpush1.msra.mxu0 0.0
    %256 = vmatprep.subr.mxu0 0.0
    %257 = vmatpush1.msra.mxu0 0.0
    %258 = vmatprep.subr.mxu0 0.0
    %259 = vmatpush1.msra.mxu0 0.0
    %260 = vmatprep.subr.mxu0 0.0
    %261 = vmatpush1.msra.mxu0 0.0
    %262 = vmatprep.subr.mxu0 0.0
    %263 = vmatpush1.msra.mxu0 0.0
    %264 = vmatprep.subr.mxu0 0.0
    %265 = vmatpush1.msra.mxu0 0.0
    %266 = vmatprep.subr.mxu0 0.0
    %267 = vmatpush1.msra.mxu0 0.0
    %268 = vmatprep.subr.mxu0 %v165
    %269 = vmatpush1.msra.mxu0 %v164
    %270 = vmatprep.subr.mxu0 %v163
    %271 = vmatpush1.msra.mxu0 %v162
    %272 = vmatprep.subr.mxu0 %v161
    %273 = vmatpush1.msra.mxu0 %v160
    %274 = vmatprep.subr.mxu0 %v159
    %275 = vmatpush1.msra.mxu0 %v158
    %276 = vmatprep.subr.mxu0 0.0
    %277 = vmatpush2.msra.mxu0 0.0
    %278 = vmatprep.subr.mxu0 0.0
    %279 = vmatpush2.msra.mxu0 0.0
    %280 = vmatprep.subr.mxu0 0.0
    %281 = vmatpush2.msra.mxu0 0.0
    %282 = vmatprep.subr.mxu0 0.0
    %283 = vmatpush2.msra.mxu0 0.0
    %284 = vmatprep.subr.mxu0 0.0
    %285 = vmatpush2.msra.mxu0 0.0
    %286 = vmatprep.subr.mxu0 0.0
    %287 = vmatpush2.msra.mxu0 0.0
    %288 = vmatprep.subr.mxu0 0.0
    %289 = vmatpush2.msra.mxu0 0.0
    %290 = vmatprep.subr.mxu0 0.0
    %291 = vmatpush2.msra.mxu0 0.0
    %292 = vmatprep.subr.mxu0 0.0
    %293 = vmatpush2.msra.mxu0 0.0
    %294 = vmatprep.subr.mxu0 0.0
    %295 = vmatpush2.msra.mxu0 0.0
    %296 = vmatprep.subr.mxu0 0.0
    %297 = vmatpush2.msra.mxu0 0.0
    %298 = vmatprep.subr.mxu0 0.0
    %299 = vmatpush2.msra.mxu0 0.0
    %300 = vmatprep.subr.mxu0 0.0
    %301 = vmatpush2.msra.mxu0 0.0
    %302 = vmatprep.subr.mxu0 0.0
    %303 = vmatpush2.msra.mxu0 0.0
    %304 = vmatprep.subr.mxu0 0.0
    %305 = vmatpush2.msra.mxu0 0.0
    %306 = vmatprep.subr.mxu0 0.0
    %307 = vmatpush2.msra.mxu0 0.0
    %308 = vmatprep.mubr.f32.mxu0 0.0
    %309 = vmatmul.mubr.f32.gmra.mxu0 %v242
    %v310 = vpop.f32.mrf.mxu0
    %v311 = vadd.f32 0.0, %v310
    %v312 = vpop.f32.mrf.mxu0
    %v313 = vadd.f32 0.0, %v312
    %314 = vdwg.mxu0
    %v316 = vsel %vm166, %v147, 0
    %318 = vmatprep.subr.mxu0 0.0
    %319 = vmatpush1.msra.mxu0 0.0
    %320 = vmatprep.subr.mxu0 0.0
    %321 = vmatpush1.msra.mxu0 0.0
    %322 = vmatprep.subr.mxu0 0.0
    %323 = vmatpush1.msra.mxu0 0.0
    %324 = vmatprep.subr.mxu0 0.0
    %325 = vmatpush1.msra.mxu0 0.0
    %326 = vmatprep.subr.mxu0 0.0
    %327 = vmatpush1.msra.mxu0 0.0
    %328 = vmatprep.subr.mxu0 0.0
    %329 = vmatpush1.msra.mxu0 0.0
    %330 = vmatprep.subr.mxu0 0.0
    %331 = vmatpush1.msra.mxu0 0.0
    %332 = vmatprep.subr.mxu0 0.0
    %333 = vmatpush1.msra.mxu0 0.0
    %334 = vmatprep.subr.mxu0 0.0
    %335 = vmatpush1.msra.mxu0 0.0
    %336 = vmatprep.subr.mxu0 0.0
    %337 = vmatpush1.msra.mxu0 0.0
    %338 = vmatprep.subr.mxu0 0.0
    %339 = vmatpush1.msra.mxu0 0.0
    %340 = vmatprep.subr.mxu0 0.0
    %341 = vmatpush1.msra.mxu0 0.0
    %342 = vmatprep.subr.mxu0 %v165
    %343 = vmatpush1.msra.mxu0 %v164
    %344 = vmatprep.subr.mxu0 %v163
    %345 = vmatpush1.msra.mxu0 %v162
    %346 = vmatprep.subr.mxu0 %v161
    %347 = vmatpush1.msra.mxu0 %v160
    %348 = vmatprep.subr.mxu0 %v159
    %349 = vmatpush1.msra.mxu0 %v158
    %350 = vmatprep.subr.mxu0 0.0
    %351 = vmatpush2.msra.mxu0 0.0
    %352 = vmatprep.subr.mxu0 0.0
    %353 = vmatpush2.msra.mxu0 0.0
    %354 = vmatprep.subr.mxu0 0.0
    %355 = vmatpush2.msra.mxu0 0.0
    %356 = vmatprep.subr.mxu0 0.0
    %357 = vmatpush2.msra.mxu0 0.0
    %358 = vmatprep.subr.mxu0 0.0
    %359 = vmatpush2.msra.mxu0 0.0
    %360 = vmatprep.subr.mxu0 0.0
    %361 = vmatpush2.msra.mxu0 0.0
    %362 = vmatprep.subr.mxu0 0.0
    %363 = vmatpush2.msra.mxu0 0.0
    %364 = vmatprep.subr.mxu0 0.0
    %365 = vmatpush2.msra.mxu0 0.0
    %366 = vmatprep.subr.mxu0 0.0
    %367 = vmatpush2.msra.mxu0 0.0
    %368 = vmatprep.subr.mxu0 0.0
    %369 = vmatpush2.msra.mxu0 0.0
    %370 = vmatprep.subr.mxu0 0.0
    %371 = vmatpush2.msra.mxu0 0.0
    %372 = vmatprep.subr.mxu0 0.0
    %373 = vmatpush2.msra.mxu0 0.0
    %374 = vmatprep.subr.mxu0 0.0
    %375 = vmatpush2.msra.mxu0 0.0
    %376 = vmatprep.subr.mxu0 0.0
    %377 = vmatpush2.msra.mxu0 0.0
    %378 = vmatprep.subr.mxu0 0.0
    %379 = vmatpush2.msra.mxu0 0.0
    %380 = vmatprep.subr.mxu0 0.0
    %381 = vmatpush2.msra.mxu0 0.0
    %382 = vmatprep.mubr.f32.mxu0 0.0
    %383 = vmatmul.mubr.f32.gmra.mxu0 %v316
    %v384 = vpop.f32.mrf.mxu0
    %v385 = vadd.f32 0.0, %v384
    %v386 = vpop.f32.mrf.mxu0
    %v387 = vadd.f32 0.0, %v386
    %388 = vdwg.mxu0
    %v390 = vsel %vm166, %v149, 0
    %392 = vmatprep.subr.mxu0 0.0
    %393 = vmatpush1.msra.mxu0 0.0
    %394 = vmatprep.subr.mxu0 0.0
    %395 = vmatpush1.msra.mxu0 0.0
    %396 = vmatprep.subr.mxu0 0.0
    %397 = vmatpush1.msra.mxu0 0.0
    %398 = vmatprep.subr.mxu0 0.0
    %399 = vmatpush1.msra.mxu0 0.0
    %400 = vmatprep.subr.mxu0 0.0
    %401 = vmatpush1.msra.mxu0 0.0
    %402 = vmatprep.subr.mxu0 0.0
    %403 = vmatpush1.msra.mxu0 0.0
    %404 = vmatprep.subr.mxu0 0.0
    %405 = vmatpush1.msra.mxu0 0.0
    %406 = vmatprep.subr.mxu0 0.0
    %407 = vmatpush1.msra.mxu0 0.0
    %408 = vmatprep.subr.mxu0 0.0
    %409 = vmatpush1.msra.mxu0 0.0
    %410 = vmatprep.subr.mxu0 0.0
    %411 = vmatpush1.msra.mxu0 0.0
    %412 = vmatprep.subr.mxu0 0.0
    %413 = vmatpush1.msra.mxu0 0.0
    %414 = vmatprep.subr.mxu0 0.0
    %415 = vmatpush1.msra.mxu0 0.0
    %416 = vmatprep.subr.mxu0 %v165
    %417 = vmatpush1.msra.mxu0 %v164
    %418 = vmatprep.subr.mxu0 %v163
    %419 = vmatpush1.msra.mxu0 %v162
    %420 = vmatprep.subr.mxu0 %v161
    %421 = vmatpush1.msra.mxu0 %v160
    %422 = vmatprep.subr.mxu0 %v159
    %423 = vmatpush1.msra.mxu0 %v158
    %424 = vmatprep.subr.mxu0 0.0
    %425 = vmatpush2.msra.mxu0 0.0
    %426 = vmatprep.subr.mxu0 0.0
    %427 = vmatpush2.msra.mxu0 0.0
    %428 = vmatprep.subr.mxu0 0.0
    %429 = vmatpush2.msra.mxu0 0.0
    %430 = vmatprep.subr.mxu0 0.0
    %431 = vmatpush2.msra.mxu0 0.0
    %432 = vmatprep.subr.mxu0 0.0
    %433 = vmatpush2.msra.mxu0 0.0
    %434 = vmatprep.subr.mxu0 0.0
    %435 = vmatpush2.msra.mxu0 0.0
    %436 = vmatprep.subr.mxu0 0.0
    %437 = vmatpush2.msra.mxu0 0.0
    %438 = vmatprep.subr.mxu0 0.0
    %439 = vmatpush2.msra.mxu0 0.0
    %440 = vmatprep.subr.mxu0 0.0
    %441 = vmatpush2.msra.mxu0 0.0
    %442 = vmatprep.subr.mxu0 0.0
    %443 = vmatpush2.msra.mxu0 0.0
    %444 = vmatprep.subr.mxu0 0.0
    %445 = vmatpush2.msra.mxu0 0.0
    %446 = vmatprep.subr.mxu0 0.0
    %447 = vmatpush2.msra.mxu0 0.0
    %448 = vmatprep.subr.mxu0 0.0
    %449 = vmatpush2.msra.mxu0 0.0
    %450 = vmatprep.subr.mxu0 0.0
    %451 = vmatpush2.msra.mxu0 0.0
    %452 = vmatprep.subr.mxu0 0.0
    %453 = vmatpush2.msra.mxu0 0.0
    %454 = vmatprep.subr.mxu0 0.0
    %455 = vmatpush2.msra.mxu0 0.0
    %456 = vmatprep.mubr.f32.mxu0 0.0
    %457 = vmatmul.mubr.f32.gmra.mxu0 %v390
    %v458 = vpop.f32.mrf.mxu0
    %v459 = vadd.f32 0.0, %v458
    %v460 = vpop.f32.mrf.mxu0
    %v461 = vadd.f32 0.0, %v460
    %462 = vdwg.mxu0
    %v464 = vsel %vm166, %v151, 0
    %466 = vmatprep.subr.mxu0 0.0
    %467 = vmatpush1.msra.mxu0 0.0
    %468 = vmatprep.subr.mxu0 0.0
    %469 = vmatpush1.msra.mxu0 0.0
    %470 = vmatprep.subr.mxu0 0.0
    %471 = vmatpush1.msra.mxu0 0.0
    %472 = vmatprep.subr.mxu0 0.0
    %473 = vmatpush1.msra.mxu0 0.0
    %474 = vmatprep.subr.mxu0 0.0
    %475 = vmatpush1.msra.mxu0 0.0
    %476 = vmatprep.subr.mxu0 0.0
    %477 = vmatpush1.msra.mxu0 0.0
    %478 = vmatprep.subr.mxu0 0.0
    %479 = vmatpush1.msra.mxu0 0.0
    %480 = vmatprep.subr.mxu0 0.0
    %481 = vmatpush1.msra.mxu0 0.0
    %482 = vmatprep.subr.mxu0 0.0
    %483 = vmatpush1.msra.mxu0 0.0
    %484 = vmatprep.subr.mxu0 0.0
    %485 = vmatpush1.msra.mxu0 0.0
    %486 = vmatprep.subr.mxu0 0.0
    %487 = vmatpush1.msra.mxu0 0.0
    %488 = vmatprep.subr.mxu0 0.0
    %489 = vmatpush1.msra.mxu0 0.0
    %490 = vmatprep.subr.mxu0 %v165
    %491 = vmatpush1.msra.mxu0 %v164
    %492 = vmatprep.subr.mxu0 %v163
    %493 = vmatpush1.msra.mxu0 %v162
    %494 = vmatprep.subr.mxu0 %v161
    %495 = vmatpush1.msra.mxu0 %v160
    %496 = vmatprep.subr.mxu0 %v159
    %497 = vmatpush1.msra.mxu0 %v158
    %498 = vmatprep.subr.mxu0 0.0
    %499 = vmatpush2.msra.mxu0 0.0
    %500 = vmatprep.subr.mxu0 0.0
    %501 = vmatpush2.msra.mxu0 0.0
    %502 = vmatprep.subr.mxu0 0.0
    %503 = vmatpush2.msra.mxu0 0.0
    %504 = vmatprep.subr.mxu0 0.0
    %505 = vmatpush2.msra.mxu0 0.0
    %506 = vmatprep.subr.mxu0 0.0
    %507 = vmatpush2.msra.mxu0 0.0
    %508 = vmatprep.subr.mxu0 0.0
    %509 = vmatpush2.msra.mxu0 0.0
    %510 = vmatprep.subr.mxu0 0.0
    %511 = vmatpush2.msra.mxu0 0.0
    %512 = vmatprep.subr.mxu0 0.0
    %513 = vmatpush2.msra.mxu0 0.0
    %514 = vmatprep.subr.mxu0 0.0
    %515 = vmatpush2.msra.mxu0 0.0
    %516 = vmatprep.subr.mxu0 0.0
    %517 = vmatpush2.msra.mxu0 0.0
    %518 = vmatprep.subr.mxu0 0.0
    %519 = vmatpush2.msra.mxu0 0.0
    %520 = vmatprep.subr.mxu0 0.0
    %521 = vmatpush2.msra.mxu0 0.0
    %522 = vmatprep.subr.mxu0 0.0
    %523 = vmatpush2.msra.mxu0 0.0
    %524 = vmatprep.subr.mxu0 0.0
    %525 = vmatpush2.msra.mxu0 0.0
    %526 = vmatprep.subr.mxu0 0.0
    %527 = vmatpush2.msra.mxu0 0.0
    %528 = vmatprep.subr.mxu0 0.0
    %529 = vmatpush2.msra.mxu0 0.0
    %530 = vmatprep.mubr.f32.mxu0 0.0
    %531 = vmatmul.mubr.f32.gmra.mxu0 %v464
    %v532 = vpop.f32.mrf.mxu0
    %v533 = vadd.f32 0.0, %v532
    %v534 = vpop.f32.mrf.mxu0
    %v535 = vadd.f32 0.0, %v534
    %536 = vdwg.mxu0
    %v538 = vsel %vm166, %v153, 0
    %540 = vmatprep.subr.mxu0 0.0
    %541 = vmatpush1.msra.mxu0 0.0
    %542 = vmatprep.subr.mxu0 0.0
    %543 = vmatpush1.msra.mxu0 0.0
    %544 = vmatprep.subr.mxu0 0.0
    %545 = vmatpush1.msra.mxu0 0.0
    %546 = vmatprep.subr.mxu0 0.0
    %547 = vmatpush1.msra.mxu0 0.0
    %548 = vmatprep.subr.mxu0 0.0
    %549 = vmatpush1.msra.mxu0 0.0
    %550 = vmatprep.subr.mxu0 0.0
    %551 = vmatpush1.msra.mxu0 0.0
    %552 = vmatprep.subr.mxu0 0.0
    %553 = vmatpush1.msra.mxu0 0.0
    %554 = vmatprep.subr.mxu0 0.0
    %555 = vmatpush1.msra.mxu0 0.0
    %556 = vmatprep.subr.mxu0 0.0
    %557 = vmatpush1.msra.mxu0 0.0
    %558 = vmatprep.subr.mxu0 0.0
    %559 = vmatpush1.msra.mxu0 0.0
    %560 = vmatprep.subr.mxu0 0.0
    %561 = vmatpush1.msra.mxu0 0.0
    %562 = vmatprep.subr.mxu0 0.0
    %563 = vmatpush1.msra.mxu0 0.0
    %564 = vmatprep.subr.mxu0 %v165
    %565 = vmatpush1.msra.mxu0 %v164
    %566 = vmatprep.subr.mxu0 %v163
    %567 = vmatpush1.msra.mxu0 %v162
    %568 = vmatprep.subr.mxu0 %v161
    %569 = vmatpush1.msra.mxu0 %v160
    %570 = vmatprep.subr.mxu0 %v159
    %571 = vmatpush1.msra.mxu0 %v158
    %572 = vmatprep.subr.mxu0 0.0
    %573 = vmatpush2.msra.mxu0 0.0
    %574 = vmatprep.subr.mxu0 0.0
    %575 = vmatpush2.msra.mxu0 0.0
    %576 = vmatprep.subr.mxu0 0.0
    %577 = vmatpush2.msra.mxu0 0.0
    %578 = vmatprep.subr.mxu0 0.0
    %579 = vmatpush2.msra.mxu0 0.0
    %580 = vmatprep.subr.mxu0 0.0
    %581 = vmatpush2.msra.mxu0 0.0
    %582 = vmatprep.subr.mxu0 0.0
    %583 = vmatpush2.msra.mxu0 0.0
    %584 = vmatprep.subr.mxu0 0.0
    %585 = vmatpush2.msra.mxu0 0.0
    %586 = vmatprep.subr.mxu0 0.0
    %587 = vmatpush2.msra.mxu0 0.0
    %588 = vmatprep.subr.mxu0 0.0
    %589 = vmatpush2.msra.mxu0 0.0
    %590 = vmatprep.subr.mxu0 0.0
    %591 = vmatpush2.msra.mxu0 0.0
    %592 = vmatprep.subr.mxu0 0.0
    %593 = vmatpush2.msra.mxu0 0.0
    %594 = vmatprep.subr.mxu0 0.0
    %595 = vmatpush2.msra.mxu0 0.0
    %596 = vmatprep.subr.mxu0 0.0
    %597 = vmatpush2.msra.mxu0 0.0
    %598 = vmatprep.subr.mxu0 0.0
    %599 = vmatpush2.msra.mxu0 0.0
    %600 = vmatprep.subr.mxu0 0.0
    %601 = vmatpush2.msra.mxu0 0.0
    %602 = vmatprep.subr.mxu0 0.0
    %603 = vmatpush2.msra.mxu0 0.0
    %604 = vmatprep.mubr.f32.mxu0 0.0
    %605 = vmatmul.mubr.f32.gmra.mxu0 %v538
    %v606 = vpop.f32.mrf.mxu0
    %v607 = vadd.f32 0.0, %v606
    %v608 = vpop.f32.mrf.mxu0
    %v609 = vadd.f32 0.0, %v608
    %610 = vdwg.mxu0
    %v612 = vsel %vm166, %v155, 0
    %614 = vmatprep.subr.mxu0 0.0
    %615 = vmatpush1.msra.mxu0 0.0
    %616 = vmatprep.subr.mxu0 0.0
    %617 = vmatpush1.msra.mxu0 0.0
    %618 = vmatprep.subr.mxu0 0.0
    %619 = vmatpush1.msra.mxu0 0.0
    %620 = vmatprep.subr.mxu0 0.0
    %621 = vmatpush1.msra.mxu0 0.0
    %622 = vmatprep.subr.mxu0 0.0
    %623 = vmatpush1.msra.mxu0 0.0
    %624 = vmatprep.subr.mxu0 0.0
    %625 = vmatpush1.msra.mxu0 0.0
    %626 = vmatprep.subr.mxu0 0.0
    %627 = vmatpush1.msra.mxu0 0.0
    %628 = vmatprep.subr.mxu0 0.0
    %629 = vmatpush1.msra.mxu0 0.0
    %630 = vmatprep.subr.mxu0 0.0
    %631 = vmatpush1.msra.mxu0 0.0
    %632 = vmatprep.subr.mxu0 0.0
    %633 = vmatpush1.msra.mxu0 0.0
    %634 = vmatprep.subr.mxu0 0.0
    %635 = vmatpush1.msra.mxu0 0.0
    %636 = vmatprep.subr.mxu0 0.0
    %637 = vmatpush1.msra.mxu0 0.0
    %638 = vmatprep.subr.mxu0 %v165
    %639 = vmatpush1.msra.mxu0 %v164
    %640 = vmatprep.subr.mxu0 %v163
    %641 = vmatpush1.msra.mxu0 %v162
    %642 = vmatprep.subr.mxu0 %v161
    %643 = vmatpush1.msra.mxu0 %v160
    %644 = vmatprep.subr.mxu0 %v159
    %645 = vmatpush1.msra.mxu0 %v158
    %646 = vmatprep.subr.mxu0 0.0
    %647 = vmatpush2.msra.mxu0 0.0
    %648 = vmatprep.subr.mxu0 0.0
    %649 = vmatpush2.msra.mxu0 0.0
    %650 = vmatprep.subr.mxu0 0.0
    %651 = vmatpush2.msra.mxu0 0.0
    %652 = vmatprep.subr.mxu0 0.0
    %653 = vmatpush2.msra.mxu0 0.0
    %654 = vmatprep.subr.mxu0 0.0
    %655 = vmatpush2.msra.mxu0 0.0
    %656 = vmatprep.subr.mxu0 0.0
    %657 = vmatpush2.msra.mxu0 0.0
    %658 = vmatprep.subr.mxu0 0.0
    %659 = vmatpush2.msra.mxu0 0.0
    %660 = vmatprep.subr.mxu0 0.0
    %661 = vmatpush2.msra.mxu0 0.0
    %662 = vmatprep.subr.mxu0 0.0
    %663 = vmatpush2.msra.mxu0 0.0
    %664 = vmatprep.subr.mxu0 0.0
    %665 = vmatpush2.msra.mxu0 0.0
    %666 = vmatprep.subr.mxu0 0.0
    %667 = vmatpush2.msra.mxu0 0.0
    %668 = vmatprep.subr.mxu0 0.0
    %669 = vmatpush2.msra.mxu0 0.0
    %670 = vmatprep.subr.mxu0 0.0
    %671 = vmatpush2.msra.mxu0 0.0
    %672 = vmatprep.subr.mxu0 0.0
    %673 = vmatpush2.msra.mxu0 0.0
    %674 = vmatprep.subr.mxu0 0.0
    %675 = vmatpush2.msra.mxu0 0.0
    %676 = vmatprep.subr.mxu0 0.0
    %677 = vmatpush2.msra.mxu0 0.0
    %678 = vmatprep.mubr.f32.mxu0 0.0
    %679 = vmatmul.mubr.f32.gmra.mxu0 %v612
    %v680 = vpop.f32.mrf.mxu0
    %v681 = vadd.f32 0.0, %v680
    %v682 = vpop.f32.mrf.mxu0
    %v683 = vadd.f32 0.0, %v682
    %684 = vdwg.mxu0
    %v686 = vsel %vm166, %v157, 0
    %688 = vmatprep.subr.mxu0 0.0
    %689 = vmatpush1.msra.mxu0 0.0
    %690 = vmatprep.subr.mxu0 0.0
    %691 = vmatpush1.msra.mxu0 0.0
    %692 = vmatprep.subr.mxu0 0.0
    %693 = vmatpush1.msra.mxu0 0.0
    %694 = vmatprep.subr.mxu0 0.0
    %695 = vmatpush1.msra.mxu0 0.0
    %696 = vmatprep.subr.mxu0 0.0
    %697 = vmatpush1.msra.mxu0 0.0
    %698 = vmatprep.subr.mxu0 0.0
    %699 = vmatpush1.msra.mxu0 0.0
    %700 = vmatprep.subr.mxu0 0.0
    %701 = vmatpush1.msra.mxu0 0.0
    %702 = vmatprep.subr.mxu0 0.0
    %703 = vmatpush1.msra.mxu0 0.0
    %704 = vmatprep.subr.mxu0 0.0
    %705 = vmatpush1.msra.mxu0 0.0
    %706 = vmatprep.subr.mxu0 0.0
    %707 = vmatpush1.msra.mxu0 0.0
    %708 = vmatprep.subr.mxu0 0.0
    %709 = vmatpush1.msra.mxu0 0.0
    %710 = vmatprep.subr.mxu0 0.0
    %711 = vmatpush1.msra.mxu0 0.0
    %712 = vmatprep.subr.mxu0 %v165
    %713 = vmatpush1.msra.mxu0 %v164
    %714 = vmatprep.subr.mxu0 %v163
    %715 = vmatpush1.msra.mxu0 %v162
    %716 = vmatprep.subr.mxu0 %v161
    %717 = vmatpush1.msra.mxu0 %v160
    %718 = vmatprep.subr.mxu0 %v159
    %719 = vmatpush1.msra.mxu0 %v158
    %720 = vmatprep.subr.mxu0 0.0
    %721 = vmatpush2.msra.mxu0 0.0
    %722 = vmatprep.subr.mxu0 0.0
    %723 = vmatpush2.msra.mxu0 0.0
    %724 = vmatprep.subr.mxu0 0.0
    %725 = vmatpush2.msra.mxu0 0.0
    %726 = vmatprep.subr.mxu0 0.0
    %727 = vmatpush2.msra.mxu0 0.0
    %728 = vmatprep.subr.mxu0 0.0
    %729 = vmatpush2.msra.mxu0 0.0
    %730 = vmatprep.subr.mxu0 0.0
    %731 = vmatpush2.msra.mxu0 0.0
    %732 = vmatprep.subr.mxu0 0.0
    %733 = vmatpush2.msra.mxu0 0.0
    %734 = vmatprep.subr.mxu0 0.0
    %735 = vmatpush2.msra.mxu0 0.0
    %736 = vmatprep.subr.mxu0 0.0
    %737 = vmatpush2.msra.mxu0 0.0
    %738 = vmatprep.subr.mxu0 0.0
    %739 = vmatpush2.msra.mxu0 0.0
    %740 = vmatprep.subr.mxu0 0.0
    %741 = vmatpush2.msra.mxu0 0.0
    %742 = vmatprep.subr.mxu0 0.0
    %743 = vmatpush2.msra.mxu0 0.0
    %744 = vmatprep.subr.mxu0 0.0
    %745 = vmatpush2.msra.mxu0 0.0
    %746 = vmatprep.subr.mxu0 0.0
    %747 = vmatpush2.msra.mxu0 0.0
    %748 = vmatprep.subr.mxu0 0.0
    %749 = vmatpush2.msra.mxu0 0.0
    %750 = vmatprep.subr.mxu0 0.0
    %751 = vmatpush2.msra.mxu0 0.0
    %752 = vmatprep.mubr.f32.mxu0 0.0
    %753 = vmatmul.mubr.f32.gmra.mxu0 %v686
    %v754 = vpop.f32.mrf.mxu0
    %v755 = vadd.f32 0.0, %v754
    %v756 = vpop.f32.mrf.mxu0
    %v757 = vadd.f32 0.0, %v756
    %758 = vdwg.mxu0
    %759 = vmatprep.subr.mxu0 0.0
    %760 = vmatpush1.msra.mxu0 0.0
    %761 = vmatprep.subr.mxu0 0.0
    %762 = vmatpush1.msra.mxu0 0.0
    %763 = vmatprep.subr.mxu0 0.0
    %764 = vmatpush1.msra.mxu0 0.0
    %765 = vmatprep.subr.mxu0 0.0
    %766 = vmatpush1.msra.mxu0 0.0
    %767 = vmatprep.subr.mxu0 0.0
    %768 = vmatpush1.msra.mxu0 0.0
    %769 = vmatprep.subr.mxu0 0.0
    %770 = vmatpush1.msra.mxu0 0.0
    %771 = vmatprep.subr.mxu0 0.0
    %772 = vmatpush1.msra.mxu0 0.0
    %773 = vmatprep.subr.mxu0 0.0
    %774 = vmatpush1.msra.mxu0 0.0
    %775 = vmatprep.subr.mxu0 0.0
    %776 = vmatpush1.msra.mxu0 0.0
    %777 = vmatprep.subr.mxu0 0.0
    %778 = vmatpush1.msra.mxu0 0.0
    %779 = vmatprep.subr.mxu0 0.0
    %780 = vmatpush1.msra.mxu0 0.0
    %781 = vmatprep.subr.mxu0 0.0
    %782 = vmatpush1.msra.mxu0 0.0
    %783 = vmatprep.subr.mxu0 %v143
    %784 = vmatpush1.msra.mxu0 %v142
    %785 = vmatprep.subr.mxu0 %v141
    %786 = vmatpush1.msra.mxu0 %v140
    %787 = vmatprep.subr.mxu0 %v139
    %788 = vmatpush1.msra.mxu0 %v138
    %789 = vmatprep.subr.mxu0 %v137
    %790 = vmatpush1.msra.mxu0 %v136
    %791 = vmatprep.subr.mxu0 0.0
    %792 = vmatpush2.msra.mxu0 0.0
    %793 = vmatprep.subr.mxu0 0.0
    %794 = vmatpush2.msra.mxu0 0.0
    %795 = vmatprep.subr.mxu0 0.0
    %796 = vmatpush2.msra.mxu0 0.0
    %797 = vmatprep.subr.mxu0 0.0
    %798 = vmatpush2.msra.mxu0 0.0
    %799 = vmatprep.subr.mxu0 0.0
    %800 = vmatpush2.msra.mxu0 0.0
    %801 = vmatprep.subr.mxu0 0.0
    %802 = vmatpush2.msra.mxu0 0.0
    %803 = vmatprep.subr.mxu0 0.0
    %804 = vmatpush2.msra.mxu0 0.0
    %805 = vmatprep.subr.mxu0 0.0
    %806 = vmatpush2.msra.mxu0 0.0
    %807 = vmatprep.subr.mxu0 0.0
    %808 = vmatpush2.msra.mxu0 0.0
    %809 = vmatprep.subr.mxu0 0.0
    %810 = vmatpush2.msra.mxu0 0.0
    %811 = vmatprep.subr.mxu0 0.0
    %812 = vmatpush2.msra.mxu0 0.0
    %813 = vmatprep.subr.mxu0 0.0
    %814 = vmatpush2.msra.mxu0 0.0
    %815 = vmatprep.subr.mxu0 0.0
    %816 = vmatpush2.msra.mxu0 0.0
    %817 = vmatprep.subr.mxu0 0.0
    %818 = vmatpush2.msra.mxu0 0.0
    %819 = vmatprep.subr.mxu0 0.0
    %820 = vmatpush2.msra.mxu0 0.0
    %821 = vmatprep.subr.mxu0 0.0
    %822 = vmatpush2.msra.mxu0 0.0
    %823 = vmatprep.mubr.f32.mxu0 0.0
    %824 = vmatmul.mubr.f32.gmra.mxu0 %v168
    %v825 = vpop.f32.mrf.mxu0
    %v826 = vadd.f32 %v755, %v825
    %v827 = vpop.f32.mrf.mxu0
    %v828 = vadd.f32 %v757, %v827
    %829 = vdwg.mxu0
    %v831 = vlaneseq
    %v832 = vshrl.u32 %v831, 7
    %v833 = vsub.s32 0, %v832
    %v834 = vrot.slane %v134, %v833
    %v835 = vlaneseq
    %v836 = vshrl.u32 %v835, 7
    %v837 = vsub.s32 1, %v836
    %v838 = vrot.slane %v134, %v837
    %v841 = vadd.f32 %v826, %v834
    %v842 = vadd.f32 %v828, %v838
    %843 = vmatprep.subr.mxu0 0.0
    %844 = vmatpush1.msra.mxu0 0.0
    %845 = vmatprep.subr.mxu0 0.0
    %846 = vmatpush1.msra.mxu0 0.0
    %847 = vmatprep.subr.mxu0 0.0
    %848 = vmatpush1.msra.mxu0 0.0
    %849 = vmatprep.subr.mxu0 0.0
    %850 = vmatpush1.msra.mxu0 0.0
    %851 = vmatprep.subr.mxu0 0.0
    %852 = vmatpush1.msra.mxu0 0.0
    %853 = vmatprep.subr.mxu0 0.0
    %854 = vmatpush1.msra.mxu0 0.0
    %855 = vmatprep.subr.mxu0 0.0
    %856 = vmatpush1.msra.mxu0 0.0
    %857 = vmatprep.subr.mxu0 0.0
    %858 = vmatpush1.msra.mxu0 0.0
    %859 = vmatprep.subr.mxu0 0.0
    %860 = vmatpush1.msra.mxu0 0.0
    %861 = vmatprep.subr.mxu0 0.0
    %862 = vmatpush1.msra.mxu0 0.0
    %863 = vmatprep.subr.mxu0 0.0
    %864 = vmatpush1.msra.mxu0 0.0
    %865 = vmatprep.subr.mxu0 0.0
    %866 = vmatpush1.msra.mxu0 0.0
    %867 = vmatprep.subr.mxu0 %v143
    %868 = vmatpush1.msra.mxu0 %v142
    %869 = vmatprep.subr.mxu0 %v141
    %870 = vmatpush1.msra.mxu0 %v140
    %871 = vmatprep.subr.mxu0 %v139
    %872 = vmatpush1.msra.mxu0 %v138
    %873 = vmatprep.subr.mxu0 %v137
    %874 = vmatpush1.msra.mxu0 %v136
    %875 = vmatprep.subr.mxu0 0.0
    %876 = vmatpush2.msra.mxu0 0.0
    %877 = vmatprep.subr.mxu0 0.0
    %878 = vmatpush2.msra.mxu0 0.0
    %879 = vmatprep.subr.mxu0 0.0
    %880 = vmatpush2.msra.mxu0 0.0
    %881 = vmatprep.subr.mxu0 0.0
    %882 = vmatpush2.msra.mxu0 0.0
    %883 = vmatprep.subr.mxu0 0.0
    %884 = vmatpush2.msra.mxu0 0.0
    %885 = vmatprep.subr.mxu0 0.0
    %886 = vmatpush2.msra.mxu0 0.0
    %887 = vmatprep.subr.mxu0 0.0
    %888 = vmatpush2.msra.mxu0 0.0
    %889 = vmatprep.subr.mxu0 0.0
    %890 = vmatpush2.msra.mxu0 0.0
    %891 = vmatprep.subr.mxu0 0.0
    %892 = vmatpush2.msra.mxu0 0.0
    %893 = vmatprep.subr.mxu0 0.0
    %894 = vmatpush2.msra.mxu0 0.0
    %895 = vmatprep.subr.mxu0 0.0
    %896 = vmatpush2.msra.mxu0 0.0
    %897 = vmatprep.subr.mxu0 0.0
    %898 = vmatpush2.msra.mxu0 0.0
    %899 = vmatprep.subr.mxu0 0.0
    %900 = vmatpush2.msra.mxu0 0.0
    %901 = vmatprep.subr.mxu0 0.0
    %902 = vmatpush2.msra.mxu0 0.0
    %903 = vmatprep.subr.mxu0 0.0
    %904 = vmatpush2.msra.mxu0 0.0
    %905 = vmatprep.subr.mxu0 0.0
    %906 = vmatpush2.msra.mxu0 0.0
    %907 = vmatprep.mubr.f32.mxu0 0.0
    %908 = vmatmul.mubr.f32.gmra.mxu0 %v242
    %v909 = vpop.f32.mrf.mxu0
    %v910 = vadd.f32 %v681, %v909
    %v911 = vpop.f32.mrf.mxu0
    %v912 = vadd.f32 %v683, %v911
    %913 = vdwg.mxu0
    %v914 = vadd.f32 %v910, %v834
    %v915 = vadd.f32 %v912, %v838
    %916 = vmatprep.subr.mxu0 0.0
    %917 = vmatpush1.msra.mxu0 0.0
    %918 = vmatprep.subr.mxu0 0.0
    %919 = vmatpush1.msra.mxu0 0.0
    %920 = vmatprep.subr.mxu0 0.0
    %921 = vmatpush1.msra.mxu0 0.0
    %922 = vmatprep.subr.mxu0 0.0
    %923 = vmatpush1.msra.mxu0 0.0
    %924 = vmatprep.subr.mxu0 0.0
    %925 = vmatpush1.msra.mxu0 0.0
    %926 = vmatprep.subr.mxu0 0.0
    %927 = vmatpush1.msra.mxu0 0.0
    %928 = vmatprep.subr.mxu0 0.0
    %929 = vmatpush1.msra.mxu0 0.0
    %930 = vmatprep.subr.mxu0 0.0
    %931 = vmatpush1.msra.mxu0 0.0
    %932 = vmatprep.subr.mxu0 0.0
    %933 = vmatpush1.msra.mxu0 0.0
    %934 = vmatprep.subr.mxu0 0.0
    %935 = vmatpush1.msra.mxu0 0.0
    %936 = vmatprep.subr.mxu0 0.0
    %937 = vmatpush1.msra.mxu0 0.0
    %938 = vmatprep.subr.mxu0 0.0
    %939 = vmatpush1.msra.mxu0 0.0
    %940 = vmatprep.subr.mxu0 %v143
    %941 = vmatpush1.msra.mxu0 %v142
    %942 = vmatprep.subr.mxu0 %v141
    %943 = vmatpush1.msra.mxu0 %v140
    %944 = vmatprep.subr.mxu0 %v139
    %945 = vmatpush1.msra.mxu0 %v138
    %946 = vmatprep.subr.mxu0 %v137
    %947 = vmatpush1.msra.mxu0 %v136
    %948 = vmatprep.subr.mxu0 0.0
    %949 = vmatpush2.msra.mxu0 0.0
    %950 = vmatprep.subr.mxu0 0.0
    %951 = vmatpush2.msra.mxu0 0.0
    %952 = vmatprep.subr.mxu0 0.0
    %953 = vmatpush2.msra.mxu0 0.0
    %954 = vmatprep.subr.mxu0 0.0
    %955 = vmatpush2.msra.mxu0 0.0
    %956 = vmatprep.subr.mxu0 0.0
    %957 = vmatpush2.msra.mxu0 0.0
    %958 = vmatprep.subr.mxu0 0.0
    %959 = vmatpush2.msra.mxu0 0.0
    %960 = vmatprep.subr.mxu0 0.0
    %961 = vmatpush2.msra.mxu0 0.0
    %962 = vmatprep.subr.mxu0 0.0
    %963 = vmatpush2.msra.mxu0 0.0
    %964 = vmatprep.subr.mxu0 0.0
    %965 = vmatpush2.msra.mxu0 0.0
    %966 = vmatprep.subr.mxu0 0.0
    %967 = vmatpush2.msra.mxu0 0.0
    %968 = vmatprep.subr.mxu0 0.0
    %969 = vmatpush2.msra.mxu0 0.0
    %970 = vmatprep.subr.mxu0 0.0
    %971 = vmatpush2.msra.mxu0 0.0
    %972 = vmatprep.subr.mxu0 0.0
    %973 = vmatpush2.msra.mxu0 0.0
    %974 = vmatprep.subr.mxu0 0.0
    %975 = vmatpush2.msra.mxu0 0.0
    %976 = vmatprep.subr.mxu0 0.0
    %977 = vmatpush2.msra.mxu0 0.0
    %978 = vmatprep.subr.mxu0 0.0
    %979 = vmatpush2.msra.mxu0 0.0
    %980 = vmatprep.mubr.f32.mxu0 0.0
    %981 = vmatmul.mubr.f32.gmra.mxu0 %v316
    %v982 = vpop.f32.mrf.mxu0
    %v983 = vadd.f32 %v607, %v982
    %v984 = vpop.f32.mrf.mxu0
    %v985 = vadd.f32 %v609, %v984
    %986 = vdwg.mxu0
    %v987 = vadd.f32 %v983, %v834
    %v988 = vadd.f32 %v985, %v838
    %989 = vmatprep.subr.mxu0 0.0
    %990 = vmatpush1.msra.mxu0 0.0
    %991 = vmatprep.subr.mxu0 0.0
    %992 = vmatpush1.msra.mxu0 0.0
    %993 = vmatprep.subr.mxu0 0.0
    %994 = vmatpush1.msra.mxu0 0.0
    %995 = vmatprep.subr.mxu0 0.0
    %996 = vmatpush1.msra.mxu0 0.0
    %997 = vmatprep.subr.mxu0 0.0
    %998 = vmatpush1.msra.mxu0 0.0
    %999 = vmatprep.subr.mxu0 0.0
    %1000 = vmatpush1.msra.mxu0 0.0
    %1001 = vmatprep.subr.mxu0 0.0
    %1002 = vmatpush1.msra.mxu0 0.0
    %1003 = vmatprep.subr.mxu0 0.0
    %1004 = vmatpush1.msra.mxu0 0.0
    %1005 = vmatprep.subr.mxu0 0.0
    %1006 = vmatpush1.msra.mxu0 0.0
    %1007 = vmatprep.subr.mxu0 0.0
    %1008 = vmatpush1.msra.mxu0 0.0
    %1009 = vmatprep.subr.mxu0 0.0
    %1010 = vmatpush1.msra.mxu0 0.0
    %1011 = vmatprep.subr.mxu0 0.0
    %1012 = vmatpush1.msra.mxu0 0.0
    %1013 = vmatprep.subr.mxu0 %v143
    %1014 = vmatpush1.msra.mxu0 %v142
    %1015 = vmatprep.subr.mxu0 %v141
    %1016 = vmatpush1.msra.mxu0 %v140
    %1017 = vmatprep.subr.mxu0 %v139
    %1018 = vmatpush1.msra.mxu0 %v138
    %1019 = vmatprep.subr.mxu0 %v137
    %1020 = vmatpush1.msra.mxu0 %v136
    %1021 = vmatprep.subr.mxu0 0.0
    %1022 = vmatpush2.msra.mxu0 0.0
    %1023 = vmatprep.subr.mxu0 0.0
    %1024 = vmatpush2.msra.mxu0 0.0
    %1025 = vmatprep.subr.mxu0 0.0
    %1026 = vmatpush2.msra.mxu0 0.0
    %1027 = vmatprep.subr.mxu0 0.0
    %1028 = vmatpush2.msra.mxu0 0.0
    %1029 = vmatprep.subr.mxu0 0.0
    %1030 = vmatpush2.msra.mxu0 0.0
    %1031 = vmatprep.subr.mxu0 0.0
    %1032 = vmatpush2.msra.mxu0 0.0
    %1033 = vmatprep.subr.mxu0 0.0
    %1034 = vmatpush2.msra.mxu0 0.0
    %1035 = vmatprep.subr.mxu0 0.0
    %1036 = vmatpush2.msra.mxu0 0.0
    %1037 = vmatprep.subr.mxu0 0.0
    %1038 = vmatpush2.msra.mxu0 0.0
    %1039 = vmatprep.subr.mxu0 0.0
    %1040 = vmatpush2.msra.mxu0 0.0
    %1041 = vmatprep.subr.mxu0 0.0
    %1042 = vmatpush2.msra.mxu0 0.0
    %1043 = vmatprep.subr.mxu0 0.0
    %1044 = vmatpush2.msra.mxu0 0.0
    %1045 = vmatprep.subr.mxu0 0.0
    %1046 = vmatpush2.msra.mxu0 0.0
    %1047 = vmatprep.subr.mxu0 0.0
    %1048 = vmatpush2.msra.mxu0 0.0
    %1049 = vmatprep.subr.mxu0 0.0
    %1050 = vmatpush2.msra.mxu0 0.0
    %1051 = vmatprep.subr.mxu0 0.0
    %1052 = vmatpush2.msra.mxu0 0.0
    %1053 = vmatprep.mubr.f32.mxu0 0.0
    %1054 = vmatmul.mubr.f32.gmra.mxu0 %v390
    %v1055 = vpop.f32.mrf.mxu0
    %v1056 = vadd.f32 %v533, %v1055
    %v1057 = vpop.f32.mrf.mxu0
    %v1058 = vadd.f32 %v535, %v1057
    %1059 = vdwg.mxu0
    %v1060 = vadd.f32 %v1056, %v834
    %v1061 = vadd.f32 %v1058, %v838
    %1062 = vmatprep.subr.mxu0 0.0
    %1063 = vmatpush1.msra.mxu0 0.0
    %1064 = vmatprep.subr.mxu0 0.0
    %1065 = vmatpush1.msra.mxu0 0.0
    %1066 = vmatprep.subr.mxu0 0.0
    %1067 = vmatpush1.msra.mxu0 0.0
    %1068 = vmatprep.subr.mxu0 0.0
    %1069 = vmatpush1.msra.mxu0 0.0
    %1070 = vmatprep.subr.mxu0 0.0
    %1071 = vmatpush1.msra.mxu0 0.0
    %1072 = vmatprep.subr.mxu0 0.0
    %1073 = vmatpush1.msra.mxu0 0.0
    %1074 = vmatprep.subr.mxu0 0.0
    %1075 = vmatpush1.msra.mxu0 0.0
    %1076 = vmatprep.subr.mxu0 0.0
    %1077 = vmatpush1.msra.mxu0 0.0
    %1078 = vmatprep.subr.mxu0 0.0
    %1079 = vmatpush1.msra.mxu0 0.0
    %1080 = vmatprep.subr.mxu0 0.0
    %1081 = vmatpush1.msra.mxu0 0.0
    %1082 = vmatprep.subr.mxu0 0.0
    %1083 = vmatpush1.msra.mxu0 0.0
    %1084 = vmatprep.subr.mxu0 0.0
    %1085 = vmatpush1.msra.mxu0 0.0
    %1086 = vmatprep.subr.mxu0 %v143
    %1087 = vmatpush1.msra.mxu0 %v142
    %1088 = vmatprep.subr.mxu0 %v141
    %1089 = vmatpush1.msra.mxu0 %v140
    %1090 = vmatprep.subr.mxu0 %v139
    %1091 = vmatpush1.msra.mxu0 %v138
    %1092 = vmatprep.subr.mxu0 %v137
    %1093 = vmatpush1.msra.mxu0 %v136
    %1094 = vmatprep.subr.mxu0 0.0
    %1095 = vmatpush2.msra.mxu0 0.0
    %1096 = vmatprep.subr.mxu0 0.0
    %1097 = vmatpush2.msra.mxu0 0.0
    %1098 = vmatprep.subr.mxu0 0.0
    %1099 = vmatpush2.msra.mxu0 0.0
    %1100 = vmatprep.subr.mxu0 0.0
    %1101 = vmatpush2.msra.mxu0 0.0
    %1102 = vmatprep.subr.mxu0 0.0
    %1103 = vmatpush2.msra.mxu0 0.0
    %1104 = vmatprep.subr.mxu0 0.0
    %1105 = vmatpush2.msra.mxu0 0.0
    %1106 = vmatprep.subr.mxu0 0.0
    %1107 = vmatpush2.msra.mxu0 0.0
    %1108 = vmatprep.subr.mxu0 0.0
    %1109 = vmatpush2.msra.mxu0 0.0
    %1110 = vmatprep.subr.mxu0 0.0
    %1111 = vmatpush2.msra.mxu0 0.0
    %1112 = vmatprep.subr.mxu0 0.0
    %1113 = vmatpush2.msra.mxu0 0.0
    %1114 = vmatprep.subr.mxu0 0.0
    %1115 = vmatpush2.msra.mxu0 0.0
    %1116 = vmatprep.subr.mxu0 0.0
    %1117 = vmatpush2.msra.mxu0 0.0
    %1118 = vmatprep.subr.mxu0 0.0
    %1119 = vmatpush2.msra.mxu0 0.0
    %1120 = vmatprep.subr.mxu0 0.0
    %1121 = vmatpush2.msra.mxu0 0.0
    %1122 = vmatprep.subr.mxu0 0.0
    %1123 = vmatpush2.msra.mxu0 0.0
    %1124 = vmatprep.subr.mxu0 0.0
    %1125 = vmatpush2.msra.mxu0 0.0
    %1126 = vmatprep.mubr.f32.mxu0 0.0
    %1127 = vmatmul.mubr.f32.gmra.mxu0 %v464
    %v1128 = vpop.f32.mrf.mxu0
    %v1129 = vadd.f32 %v459, %v1128
    %v1130 = vpop.f32.mrf.mxu0
    %v1131 = vadd.f32 %v461, %v1130
    %1132 = vdwg.mxu0
    %v1133 = vadd.f32 %v1129, %v834
    %v1134 = vadd.f32 %v1131, %v838
    %1135 = vmatprep.subr.mxu0 0.0
    %1136 = vmatpush1.msra.mxu0 0.0
    %1137 = vmatprep.subr.mxu0 0.0
    %1138 = vmatpush1.msra.mxu0 0.0
    %1139 = vmatprep.subr.mxu0 0.0
    %1140 = vmatpush1.msra.mxu0 0.0
    %1141 = vmatprep.subr.mxu0 0.0
    %1142 = vmatpush1.msra.mxu0 0.0
    %1143 = vmatprep.subr.mxu0 0.0
    %1144 = vmatpush1.msra.mxu0 0.0
    %1145 = vmatprep.subr.mxu0 0.0
    %1146 = vmatpush1.msra.mxu0 0.0
    %1147 = vmatprep.subr.mxu0 0.0
    %1148 = vmatpush1.msra.mxu0 0.0
    %1149 = vmatprep.subr.mxu0 0.0
    %1150 = vmatpush1.msra.mxu0 0.0
    %1151 = vmatprep.subr.mxu0 0.0
    %1152 = vmatpush1.msra.mxu0 0.0
    %1153 = vmatprep.subr.mxu0 0.0
    %1154 = vmatpush1.msra.mxu0 0.0
    %1155 = vmatprep.subr.mxu0 0.0
    %1156 = vmatpush1.msra.mxu0 0.0
    %1157 = vmatprep.subr.mxu0 0.0
    %1158 = vmatpush1.msra.mxu0 0.0
    %1159 = vmatprep.subr.mxu0 %v143
    %1160 = vmatpush1.msra.mxu0 %v142
    %1161 = vmatprep.subr.mxu0 %v141
    %1162 = vmatpush1.msra.mxu0 %v140
    %1163 = vmatprep.subr.mxu0 %v139
    %1164 = vmatpush1.msra.mxu0 %v138
    %1165 = vmatprep.subr.mxu0 %v137
    %1166 = vmatpush1.msra.mxu0 %v136
    %1167 = vmatprep.subr.mxu0 0.0
    %1168 = vmatpush2.msra.mxu0 0.0
    %1169 = vmatprep.subr.mxu0 0.0
    %1170 = vmatpush2.msra.mxu0 0.0
    %1171 = vmatprep.subr.mxu0 0.0
    %1172 = vmatpush2.msra.mxu0 0.0
    %1173 = vmatprep.subr.mxu0 0.0
    %1174 = vmatpush2.msra.mxu0 0.0
    %1175 = vmatprep.subr.mxu0 0.0
    %1176 = vmatpush2.msra.mxu0 0.0
    %1177 = vmatprep.subr.mxu0 0.0
    %1178 = vmatpush2.msra.mxu0 0.0
    %1179 = vmatprep.subr.mxu0 0.0
    %1180 = vmatpush2.msra.mxu0 0.0
    %1181 = vmatprep.subr.mxu0 0.0
    %1182 = vmatpush2.msra.mxu0 0.0
    %1183 = vmatprep.subr.mxu0 0.0
    %1184 = vmatpush2.msra.mxu0 0.0
    %1185 = vmatprep.subr.mxu0 0.0
    %1186 = vmatpush2.msra.mxu0 0.0
    %1187 = vmatprep.subr.mxu0 0.0
    %1188 = vmatpush2.msra.mxu0 0.0
    %1189 = vmatprep.subr.mxu0 0.0
    %1190 = vmatpush2.msra.mxu0 0.0
    %1191 = vmatprep.subr.mxu0 0.0
    %1192 = vmatpush2.msra.mxu0 0.0
    %1193 = vmatprep.subr.mxu0 0.0
    %1194 = vmatpush2.msra.mxu0 0.0
    %1195 = vmatprep.subr.mxu0 0.0
    %1196 = vmatpush2.msra.mxu0 0.0
    %1197 = vmatprep.subr.mxu0 0.0
    %1198 = vmatpush2.msra.mxu0 0.0
    %1199 = vmatprep.mubr.f32.mxu0 0.0
    %1200 = vmatmul.mubr.f32.gmra.mxu0 %v538
    %v1201 = vpop.f32.mrf.mxu0
    %v1202 = vadd.f32 %v385, %v1201
    %v1203 = vpop.f32.mrf.mxu0
    %v1204 = vadd.f32 %v387, %v1203
    %1205 = vdwg.mxu0
    %v1206 = vadd.f32 %v1202, %v834
    %v1207 = vadd.f32 %v1204, %v838
    %1208 = vmatprep.subr.mxu0 0.0
    %1209 = vmatpush1.msra.mxu0 0.0
    %1210 = vmatprep.subr.mxu0 0.0
    %1211 = vmatpush1.msra.mxu0 0.0
    %1212 = vmatprep.subr.mxu0 0.0
    %1213 = vmatpush1.msra.mxu0 0.0
    %1214 = vmatprep.subr.mxu0 0.0
    %1215 = vmatpush1.msra.mxu0 0.0
    %1216 = vmatprep.subr.mxu0 0.0
    %1217 = vmatpush1.msra.mxu0 0.0
    %1218 = vmatprep.subr.mxu0 0.0
    %1219 = vmatpush1.msra.mxu0 0.0
    %1220 = vmatprep.subr.mxu0 0.0
    %1221 = vmatpush1.msra.mxu0 0.0
    %1222 = vmatprep.subr.mxu0 0.0
    %1223 = vmatpush1.msra.mxu0 0.0
    %1224 = vmatprep.subr.mxu0 0.0
    %1225 = vmatpush1.msra.mxu0 0.0
    %1226 = vmatprep.subr.mxu0 0.0
    %1227 = vmatpush1.msra.mxu0 0.0
    %1228 = vmatprep.subr.mxu0 0.0
    %1229 = vmatpush1.msra.mxu0 0.0
    %1230 = vmatprep.subr.mxu0 0.0
    %1231 = vmatpush1.msra.mxu0 0.0
    %1232 = vmatprep.subr.mxu0 %v143
    %1233 = vmatpush1.msra.mxu0 %v142
    %1234 = vmatprep.subr.mxu0 %v141
    %1235 = vmatpush1.msra.mxu0 %v140
    %1236 = vmatprep.subr.mxu0 %v139
    %1237 = vmatpush1.msra.mxu0 %v138
    %1238 = vmatprep.subr.mxu0 %v137
    %1239 = vmatpush1.msra.mxu0 %v136
    %1240 = vmatprep.subr.mxu0 0.0
    %1241 = vmatpush2.msra.mxu0 0.0
    %1242 = vmatprep.subr.mxu0 0.0
    %1243 = vmatpush2.msra.mxu0 0.0
    %1244 = vmatprep.subr.mxu0 0.0
    %1245 = vmatpush2.msra.mxu0 0.0
    %1246 = vmatprep.subr.mxu0 0.0
    %1247 = vmatpush2.msra.mxu0 0.0
    %1248 = vmatprep.subr.mxu0 0.0
    %1249 = vmatpush2.msra.mxu0 0.0
    %1250 = vmatprep.subr.mxu0 0.0
    %1251 = vmatpush2.msra.mxu0 0.0
    %1252 = vmatprep.subr.mxu0 0.0
    %1253 = vmatpush2.msra.mxu0 0.0
    %1254 = vmatprep.subr.mxu0 0.0
    %1255 = vmatpush2.msra.mxu0 0.0
    %1256 = vmatprep.subr.mxu0 0.0
    %1257 = vmatpush2.msra.mxu0 0.0
    %1258 = vmatprep.subr.mxu0 0.0
    %1259 = vmatpush2.msra.mxu0 0.0
    %1260 = vmatprep.subr.mxu0 0.0
    %1261 = vmatpush2.msra.mxu0 0.0
    %1262 = vmatprep.subr.mxu0 0.0
    %1263 = vmatpush2.msra.mxu0 0.0
    %1264 = vmatprep.subr.mxu0 0.0
    %1265 = vmatpush2.msra.mxu0 0.0
    %1266 = vmatprep.subr.mxu0 0.0
    %1267 = vmatpush2.msra.mxu0 0.0
    %1268 = vmatprep.subr.mxu0 0.0
    %1269 = vmatpush2.msra.mxu0 0.0
    %1270 = vmatprep.subr.mxu0 0.0
    %1271 = vmatpush2.msra.mxu0 0.0
    %1272 = vmatprep.mubr.f32.mxu0 0.0
    %1273 = vmatmul.mubr.f32.gmra.mxu0 %v612
    %v1274 = vpop.f32.mrf.mxu0
    %v1275 = vadd.f32 %v311, %v1274
    %v1276 = vpop.f32.mrf.mxu0
    %v1277 = vadd.f32 %v313, %v1276
    %1278 = vdwg.mxu0
    %v1279 = vadd.f32 %v1275, %v834
    %v1280 = vadd.f32 %v1277, %v838
    %1281 = vmatprep.subr.mxu0 0.0
    %1282 = vmatpush1.msra.mxu0 0.0
    %1283 = vmatprep.subr.mxu0 0.0
    %1284 = vmatpush1.msra.mxu0 0.0
    %1285 = vmatprep.subr.mxu0 0.0
    %1286 = vmatpush1.msra.mxu0 0.0
    %1287 = vmatprep.subr.mxu0 0.0
    %1288 = vmatpush1.msra.mxu0 0.0
    %1289 = vmatprep.subr.mxu0 0.0
    %1290 = vmatpush1.msra.mxu0 0.0
    %1291 = vmatprep.subr.mxu0 0.0
    %1292 = vmatpush1.msra.mxu0 0.0
    %1293 = vmatprep.subr.mxu0 0.0
    %1294 = vmatpush1.msra.mxu0 0.0
    %1295 = vmatprep.subr.mxu0 0.0
    %1296 = vmatpush1.msra.mxu0 0.0
    %1297 = vmatprep.subr.mxu0 0.0
    %1298 = vmatpush1.msra.mxu0 0.0
    %1299 = vmatprep.subr.mxu0 0.0
    %1300 = vmatpush1.msra.mxu0 0.0
    %1301 = vmatprep.subr.mxu0 0.0
    %1302 = vmatpush1.msra.mxu0 0.0
    %1303 = vmatprep.subr.mxu0 0.0
    %1304 = vmatpush1.msra.mxu0 0.0
    %1305 = vmatprep.subr.mxu0 %v143
    %1306 = vmatpush1.msra.mxu0 %v142
    %1307 = vmatprep.subr.mxu0 %v141
    %1308 = vmatpush1.msra.mxu0 %v140
    %1309 = vmatprep.subr.mxu0 %v139
    %1310 = vmatpush1.msra.mxu0 %v138
    %1311 = vmatprep.subr.mxu0 %v137
    %1312 = vmatpush1.msra.mxu0 %v136
    %1313 = vmatprep.subr.mxu0 0.0
    %1314 = vmatpush2.msra.mxu0 0.0
    %1315 = vmatprep.subr.mxu0 0.0
    %1316 = vmatpush2.msra.mxu0 0.0
    %1317 = vmatprep.subr.mxu0 0.0
    %1318 = vmatpush2.msra.mxu0 0.0
    %1319 = vmatprep.subr.mxu0 0.0
    %1320 = vmatpush2.msra.mxu0 0.0
    %1321 = vmatprep.subr.mxu0 0.0
    %1322 = vmatpush2.msra.mxu0 0.0
    %1323 = vmatprep.subr.mxu0 0.0
    %1324 = vmatpush2.msra.mxu0 0.0
    %1325 = vmatprep.subr.mxu0 0.0
    %1326 = vmatpush2.msra.mxu0 0.0
    %1327 = vmatprep.subr.mxu0 0.0
    %1328 = vmatpush2.msra.mxu0 0.0
    %1329 = vmatprep.subr.mxu0 0.0
    %1330 = vmatpush2.msra.mxu0 0.0
    %1331 = vmatprep.subr.mxu0 0.0
    %1332 = vmatpush2.msra.mxu0 0.0
    %1333 = vmatprep.subr.mxu0 0.0
    %1334 = vmatpush2.msra.mxu0 0.0
    %1335 = vmatprep.subr.mxu0 0.0
    %1336 = vmatpush2.msra.mxu0 0.0
    %1337 = vmatprep.subr.mxu0 0.0
    %1338 = vmatpush2.msra.mxu0 0.0
    %1339 = vmatprep.subr.mxu0 0.0
    %1340 = vmatpush2.msra.mxu0 0.0
    %1341 = vmatprep.subr.mxu0 0.0
    %1342 = vmatpush2.msra.mxu0 0.0
    %1343 = vmatprep.subr.mxu0 0.0
    %1344 = vmatpush2.msra.mxu0 0.0
    %1345 = vmatprep.mubr.f32.mxu0 0.0
    %1346 = vmatmul.mubr.f32.gmra.mxu0 %v686
    %v1347 = vpop.f32.mrf.mxu0
    %v1348 = vadd.f32 %v237, %v1347
    %v1349 = vpop.f32.mrf.mxu0
    %v1350 = vadd.f32 %v239, %v1349
    %1351 = vdwg.mxu0
    %v1352 = vadd.f32 %v1348, %v834
    %v1353 = vadd.f32 %v1350, %v838
    %v1354 = vld [vmem:[#allocation8] sm:$0xff]
    %v1355 = vld [vmem:[#allocation8 + $0x8] sm:$0xff]
    %v1356 = vld [vmem:[#allocation8 + $0x10] sm:$0xff]
    %v1357 = vld [vmem:[#allocation8 + $0x18] sm:$0xff]
    %v1358 = vld [vmem:[#allocation8 + $0x20] sm:$0xff]
    %v1359 = vld [vmem:[#allocation8 + $0x28] sm:$0xff]
    %v1360 = vld [vmem:[#allocation8 + $0x30] sm:$0xff]
    %v1361 = vld [vmem:[#allocation8 + $0x38] sm:$0xff]
    %v1362 = vld [vmem:[#allocation8 + $0x40] sm:$0xff]
    %v1363 = vld [vmem:[#allocation8 + $0x48] sm:$0xff]
    %v1364 = vld [vmem:[#allocation8 + $0x50] sm:$0xff]
    %v1365 = vld [vmem:[#allocation8 + $0x58] sm:$0xff]
    %v1366 = vld [vmem:[#allocation8 + $0x60] sm:$0xff]
    %v1367 = vld [vmem:[#allocation8 + $0x68] sm:$0xff]
    %v1368 = vld [vmem:[#allocation8 + $0x70] sm:$0xff]
    %v1369 = vld [vmem:[#allocation8 + $0x78] sm:$0xff]
    %vm1370 = vcmask 523264
    %v1372 = vsel %vm1370, 0.0, 0
    %1374 = vmatprep.subr.mxu0 0.0
    %1375 = vmatpush1.msra.mxu0 0.0
    %1376 = vmatprep.subr.mxu0 0.0
    %1377 = vmatpush1.msra.mxu0 0.0
    %1378 = vmatprep.subr.mxu0 0.0
    %1379 = vmatpush1.msra.mxu0 0.0
    %1380 = vmatprep.subr.mxu0 0.0
    %1381 = vmatpush1.msra.mxu0 0.0
    %1382 = vmatprep.subr.mxu0 0.0
    %1383 = vmatpush1.msra.mxu0 0.0
    %1384 = vmatprep.subr.mxu0 0.0
    %1385 = vmatpush1.msra.mxu0 0.0
    %1386 = vmatprep.subr.mxu0 0.0
    %1387 = vmatpush1.msra.mxu0 0.0
    %1388 = vmatprep.subr.mxu0 0.0
    %1389 = vmatpush1.msra.mxu0 0.0
    %1390 = vmatprep.subr.mxu0 %v1369
    %1391 = vmatpush1.msra.mxu0 %v1368
    %1392 = vmatprep.subr.mxu0 %v1367
    %1393 = vmatpush1.msra.mxu0 %v1366
    %1394 = vmatprep.subr.mxu0 %v1365
    %1395 = vmatpush1.msra.mxu0 %v1364
    %1396 = vmatprep.subr.mxu0 %v1363
    %1397 = vmatpush1.msra.mxu0 %v1362
    %1398 = vmatprep.subr.mxu0 %v1361
    %1399 = vmatpush1.msra.mxu0 %v1360
    %1400 = vmatprep.subr.mxu0 %v1359
    %1401 = vmatpush1.msra.mxu0 %v1358
    %1402 = vmatprep.subr.mxu0 %v1357
    %1403 = vmatpush1.msra.mxu0 %v1356
    %1404 = vmatprep.subr.mxu0 %v1355
    %1405 = vmatpush1.msra.mxu0 %v1354
    %1406 = vmatprep.subr.mxu0 0.0
    %1407 = vmatpush2.msra.mxu0 0.0
    %1408 = vmatprep.subr.mxu0 0.0
    %1409 = vmatpush2.msra.mxu0 0.0
    %1410 = vmatprep.subr.mxu0 0.0
    %1411 = vmatpush2.msra.mxu0 0.0
    %1412 = vmatprep.subr.mxu0 0.0
    %1413 = vmatpush2.msra.mxu0 0.0
    %1414 = vmatprep.subr.mxu0 0.0
    %1415 = vmatpush2.msra.mxu0 0.0
    %1416 = vmatprep.subr.mxu0 0.0
    %1417 = vmatpush2.msra.mxu0 0.0
    %1418 = vmatprep.subr.mxu0 0.0
    %1419 = vmatpush2.msra.mxu0 0.0
    %1420 = vmatprep.subr.mxu0 0.0
    %1421 = vmatpush2.msra.mxu0 0.0
    %1422 = vmatprep.subr.mxu0 0.0
    %1423 = vmatpush2.msra.mxu0 0.0
    %1424 = vmatprep.subr.mxu0 0.0
    %1425 = vmatpush2.msra.mxu0 0.0
    %1426 = vmatprep.subr.mxu0 0.0
    %1427 = vmatpush2.msra.mxu0 0.0
    %1428 = vmatprep.subr.mxu0 0.0
    %1429 = vmatpush2.msra.mxu0 0.0
    %1430 = vmatprep.subr.mxu0 0.0
    %1431 = vmatpush2.msra.mxu0 0.0
    %1432 = vmatprep.subr.mxu0 0.0
    %1433 = vmatpush2.msra.mxu0 0.0
    %1434 = vmatprep.subr.mxu0 0.0
    %1435 = vmatpush2.msra.mxu0 0.0
    %1436 = vmatprep.subr.mxu0 0.0
    %1437 = vmatpush2.msra.mxu0 0.0
    %1438 = vmatprep.mubr.f32.mxu0 0.0
    %1439 = vmatmul.mubr.f32.gmra.mxu0 %v1372
    %v1440 = vpop.f32.mrf.mxu0
    %v1441 = vadd.f32 0.0, %v1440
    %v1442 = vpop.f32.mrf.mxu0
    %v1443 = vadd.f32 0.0, %v1442
    %1444 = vdwg.mxu0
    %v1445 = vadd.f32 %v841, %v1441
    %v1446 = vadd.f32 %v842, %v1443
    %v1447 = vxor.u32 %v1445, 2147483648
    %v1448 = vmul.f32 %v1447, 1.442695
    %v1449 = vpow.pop %v1448
    %v1450 = vadd.f32 %v1449, 1.0
    %v1451 = vrcp.pop %v1450
    %v1452 = vmul.f32 1.0, %v1451
    %v1453 = vtanh.pop %v1446
    %v1454 = vxor.u32 %v1446, 2147483648
    %v1455 = vmul.f32 %v1454, 1.442695
    %v1456 = vpow.pop %v1455
    %v1457 = vadd.f32 %v1456, 1.0
    %v1458 = vrcp.pop %v1457
    %v1459 = vmul.f32 1.0, %v1458
    %v1460 = vmul.f32 %v1452, 0.0
    %v1461 = vmul.f32 %v1452, %v1453
    %1463 = vrot.lane.b32.xlu0 %v1461, 64
    %v1464 = vpop.permute.xlu0 %1463
    %v1466 = vadd.f32 %v1460, %v1464
    %v1467 = vtanh.pop %v1466
    %v1468 = vmul.f32 %v1459, %v1467
    %1470 = vrot.lane.b32.xlu0 %v1468, 64
    %v1471 = vpop.permute.xlu0 %1470
    %v1472 = vsel %vm1370, %v1471, 0
    %1474 = vmatprep.subr.mxu0 0.0
    %1475 = vmatpush1.msra.mxu0 0.0
    %1476 = vmatprep.subr.mxu0 0.0
    %1477 = vmatpush1.msra.mxu0 0.0
    %1478 = vmatprep.subr.mxu0 0.0
    %1479 = vmatpush1.msra.mxu0 0.0
    %1480 = vmatprep.subr.mxu0 0.0
    %1481 = vmatpush1.msra.mxu0 0.0
    %1482 = vmatprep.subr.mxu0 0.0
    %1483 = vmatpush1.msra.mxu0 0.0
    %1484 = vmatprep.subr.mxu0 0.0
    %1485 = vmatpush1.msra.mxu0 0.0
    %1486 = vmatprep.subr.mxu0 0.0
    %1487 = vmatpush1.msra.mxu0 0.0
    %1488 = vmatprep.subr.mxu0 0.0
    %1489 = vmatpush1.msra.mxu0 0.0
    %1490 = vmatprep.subr.mxu0 %v1369
    %1491 = vmatpush1.msra.mxu0 %v1368
    %1492 = vmatprep.subr.mxu0 %v1367
    %1493 = vmatpush1.msra.mxu0 %v1366
    %1494 = vmatprep.subr.mxu0 %v1365
    %1495 = vmatpush1.msra.mxu0 %v1364
    %1496 = vmatprep.subr.mxu0 %v1363
    %1497 = vmatpush1.msra.mxu0 %v1362
    %1498 = vmatprep.subr.mxu0 %v1361
    %1499 = vmatpush1.msra.mxu0 %v1360
    %1500 = vmatprep.subr.mxu0 %v1359
    %1501 = vmatpush1.msra.mxu0 %v1358
    %1502 = vmatprep.subr.mxu0 %v1357
    %1503 = vmatpush1.msra.mxu0 %v1356
    %1504 = vmatprep.subr.mxu0 %v1355
    %1505 = vmatpush1.msra.mxu0 %v1354
    %1506 = vmatprep.subr.mxu0 0.0
    %1507 = vmatpush2.msra.mxu0 0.0
    %1508 = vmatprep.subr.mxu0 0.0
    %1509 = vmatpush2.msra.mxu0 0.0
    %1510 = vmatprep.subr.mxu0 0.0
    %1511 = vmatpush2.msra.mxu0 0.0
    %1512 = vmatprep.subr.mxu0 0.0
    %1513 = vmatpush2.msra.mxu0 0.0
    %1514 = vmatprep.subr.mxu0 0.0
    %1515 = vmatpush2.msra.mxu0 0.0
    %1516 = vmatprep.subr.mxu0 0.0
    %1517 = vmatpush2.msra.mxu0 0.0
    %1518 = vmatprep.subr.mxu0 0.0
    %1519 = vmatpush2.msra.mxu0 0.0
    %1520 = vmatprep.subr.mxu0 0.0
    %1521 = vmatpush2.msra.mxu0 0.0
    %1522 = vmatprep.subr.mxu0 0.0
    %1523 = vmatpush2.msra.mxu0 0.0
    %1524 = vmatprep.subr.mxu0 0.0
    %1525 = vmatpush2.msra.mxu0 0.0
    %1526 = vmatprep.subr.mxu0 0.0
    %1527 = vmatpush2.msra.mxu0 0.0
    %1528 = vmatprep.subr.mxu0 0.0
    %1529 = vmatpush2.msra.mxu0 0.0
    %1530 = vmatprep.subr.mxu0 0.0
    %1531 = vmatpush2.msra.mxu0 0.0
    %1532 = vmatprep.subr.mxu0 0.0
    %1533 = vmatpush2.msra.mxu0 0.0
    %1534 = vmatprep.subr.mxu0 0.0
    %1535 = vmatpush2.msra.mxu0 0.0
    %1536 = vmatprep.subr.mxu0 0.0
    %1537 = vmatpush2.msra.mxu0 0.0
    %1538 = vmatprep.mubr.f32.mxu0 0.0
    %1539 = vmatmul.mubr.f32.gmra.mxu0 %v1472
    %v1540 = vpop.f32.mrf.mxu0
    %v1541 = vadd.f32 0.0, %v1540
    %v1542 = vpop.f32.mrf.mxu0
    %v1543 = vadd.f32 0.0, %v1542
    %1544 = vdwg.mxu0
    %v1545 = vadd.f32 %v914, %v1541
    %v1546 = vadd.f32 %v915, %v1543
    %v1547 = vxor.u32 %v1545, 2147483648
    %v1548 = vmul.f32 %v1547, 1.442695
    %v1549 = vpow.pop %v1548
    %v1550 = vadd.f32 %v1549, 1.0
    %v1551 = vrcp.pop %v1550
    %v1552 = vmul.f32 1.0, %v1551
    %v1553 = vtanh.pop %v1546
    %v1554 = vxor.u32 %v1546, 2147483648
    %v1555 = vmul.f32 %v1554, 1.442695
    %v1556 = vpow.pop %v1555
    %v1557 = vadd.f32 %v1556, 1.0
    %v1558 = vrcp.pop %v1557
    %v1559 = vmul.f32 1.0, %v1558
    %v1560 = vmul.f32 %v1552, %v1466
    %v1561 = vmul.f32 %v1552, %v1553
    %1563 = vrot.lane.b32.xlu0 %v1561, 64
    %v1564 = vpop.permute.xlu0 %1563
    %v1566 = vadd.f32 %v1560, %v1564
    %v1567 = vtanh.pop %v1566
    %v1568 = vmul.f32 %v1559, %v1567
    %v1569 = vmax.f32 %v1468, %v1568
    %1571 = vrot.lane.b32.xlu0 %v1568, 64
    %v1572 = vpop.permute.xlu0 %1571
    %v1573 = vsel %vm1370, %v1572, 0
    %1575 = vmatprep.subr.mxu0 0.0
    %1576 = vmatpush1.msra.mxu0 0.0
    %1577 = vmatprep.subr.mxu0 0.0
    %1578 = vmatpush1.msra.mxu0 0.0
    %1579 = vmatprep.subr.mxu0 0.0
    %1580 = vmatpush1.msra.mxu0 0.0
    %1581 = vmatprep.subr.mxu0 0.0
    %1582 = vmatpush1.msra.mxu0 0.0
    %1583 = vmatprep.subr.mxu0 0.0
    %1584 = vmatpush1.msra.mxu0 0.0
    %1585 = vmatprep.subr.mxu0 0.0
    %1586 = vmatpush1.msra.mxu0 0.0
    %1587 = vmatprep.subr.mxu0 0.0
    %1588 = vmatpush1.msra.mxu0 0.0
    %1589 = vmatprep.subr.mxu0 0.0
    %1590 = vmatpush1.msra.mxu0 0.0
    %1591 = vmatprep.subr.mxu0 %v1369
    %1592 = vmatpush1.msra.mxu0 %v1368
    %1593 = vmatprep.subr.mxu0 %v1367
    %1594 = vmatpush1.msra.mxu0 %v1366
    %1595 = vmatprep.subr.mxu0 %v1365
    %1596 = vmatpush1.msra.mxu0 %v1364
    %1597 = vmatprep.subr.mxu0 %v1363
    %1598 = vmatpush1.msra.mxu0 %v1362
    %1599 = vmatprep.subr.mxu0 %v1361
    %1600 = vmatpush1.msra.mxu0 %v1360
    %1601 = vmatprep.subr.mxu0 %v1359
    %1602 = vmatpush1.msra.mxu0 %v1358
    %1603 = vmatprep.subr.mxu0 %v1357
    %1604 = vmatpush1.msra.mxu0 %v1356
    %1605 = vmatprep.subr.mxu0 %v1355
    %1606 = vmatpush1.msra.mxu0 %v1354
    %1607 = vmatprep.subr.mxu0 0.0
    %1608 = vmatpush2.msra.mxu0 0.0
    %1609 = vmatprep.subr.mxu0 0.0
    %1610 = vmatpush2.msra.mxu0 0.0
    %1611 = vmatprep.subr.mxu0 0.0
    %1612 = vmatpush2.msra.mxu0 0.0
    %1613 = vmatprep.subr.mxu0 0.0
    %1614 = vmatpush2.msra.mxu0 0.0
    %1615 = vmatprep.subr.mxu0 0.0
    %1616 = vmatpush2.msra.mxu0 0.0
    %1617 = vmatprep.subr.mxu0 0.0
    %1618 = vmatpush2.msra.mxu0 0.0
    %1619 = vmatprep.subr.mxu0 0.0
    %1620 = vmatpush2.msra.mxu0 0.0
    %1621 = vmatprep.subr.mxu0 0.0
    %1622 = vmatpush2.msra.mxu0 0.0
    %1623 = vmatprep.subr.mxu0 0.0
    %1624 = vmatpush2.msra.mxu0 0.0
    %1625 = vmatprep.subr.mxu0 0.0
    %1626 = vmatpush2.msra.mxu0 0.0
    %1627 = vmatprep.subr.mxu0 0.0
    %1628 = vmatpush2.msra.mxu0 0.0
    %1629 = vmatprep.subr.mxu0 0.0
    %1630 = vmatpush2.msra.mxu0 0.0
    %1631 = vmatprep.subr.mxu0 0.0
    %1632 = vmatpush2.msra.mxu0 0.0
    %1633 = vmatprep.subr.mxu0 0.0
    %1634 = vmatpush2.msra.mxu0 0.0
    %1635 = vmatprep.subr.mxu0 0.0
    %1636 = vmatpush2.msra.mxu0 0.0
    %1637 = vmatprep.subr.mxu0 0.0
    %1638 = vmatpush2.msra.mxu0 0.0
    %1639 = vmatprep.mubr.f32.mxu0 0.0
    %1640 = vmatmul.mubr.f32.gmra.mxu0 %v1573
    %v1641 = vpop.f32.mrf.mxu0
    %v1642 = vadd.f32 0.0, %v1641
    %v1643 = vpop.f32.mrf.mxu0
    %v1644 = vadd.f32 0.0, %v1643
    %1645 = vdwg.mxu0
    %v1646 = vadd.f32 %v987, %v1642
    %v1647 = vadd.f32 %v988, %v1644
    %v1648 = vxor.u32 %v1646, 2147483648
    %v1649 = vmul.f32 %v1648, 1.442695
    %v1650 = vpow.pop %v1649
    %v1651 = vadd.f32 %v1650, 1.0
    %v1652 = vrcp.pop %v1651
    %v1653 = vmul.f32 1.0, %v1652
    %v1654 = vtanh.pop %v1647
    %v1655 = vxor.u32 %v1647, 2147483648
    %v1656 = vmul.f32 %v1655, 1.442695
    %v1657 = vpow.pop %v1656
    %v1658 = vadd.f32 %v1657, 1.0
    %v1659 = vrcp.pop %v1658
    %v1660 = vmul.f32 1.0, %v1659
    %v1661 = vmul.f32 %v1653, %v1566
    %v1662 = vmul.f32 %v1653, %v1654
    %1664 = vrot.lane.b32.xlu0 %v1662, 64
    %v1665 = vpop.permute.xlu0 %1664
    %v1667 = vadd.f32 %v1661, %v1665
    %v1668 = vtanh.pop %v1667
    %v1669 = vmul.f32 %v1660, %v1668
    %v1670 = vmax.f32 %v1569, %v1669
    %1672 = vrot.lane.b32.xlu0 %v1669, 64
    %v1673 = vpop.permute.xlu0 %1672
    %v1674 = vsel %vm1370, %v1673, 0
    %1676 = vmatprep.subr.mxu0 0.0
    %1677 = vmatpush1.msra.mxu0 0.0
    %1678 = vmatprep.subr.mxu0 0.0
    %1679 = vmatpush1.msra.mxu0 0.0
    %1680 = vmatprep.subr.mxu0 0.0
    %1681 = vmatpush1.msra.mxu0 0.0
    %1682 = vmatprep.subr.mxu0 0.0
    %1683 = vmatpush1.msra.mxu0 0.0
    %1684 = vmatprep.subr.mxu0 0.0
    %1685 = vmatpush1.msra.mxu0 0.0
    %1686 = vmatprep.subr.mxu0 0.0
    %1687 = vmatpush1.msra.mxu0 0.0
    %1688 = vmatprep.subr.mxu0 0.0
    %1689 = vmatpush1.msra.mxu0 0.0
    %1690 = vmatprep.subr.mxu0 0.0
    %1691 = vmatpush1.msra.mxu0 0.0
    %1692 = vmatprep.subr.mxu0 %v1369
    %1693 = vmatpush1.msra.mxu0 %v1368
    %1694 = vmatprep.subr.mxu0 %v1367
    %1695 = vmatpush1.msra.mxu0 %v1366
    %1696 = vmatprep.subr.mxu0 %v1365
    %1697 = vmatpush1.msra.mxu0 %v1364
    %1698 = vmatprep.subr.mxu0 %v1363
    %1699 = vmatpush1.msra.mxu0 %v1362
    %1700 = vmatprep.subr.mxu0 %v1361
    %1701 = vmatpush1.msra.mxu0 %v1360
    %1702 = vmatprep.subr.mxu0 %v1359
    %1703 = vmatpush1.msra.mxu0 %v1358
    %1704 = vmatprep.subr.mxu0 %v1357
    %1705 = vmatpush1.msra.mxu0 %v1356
    %1706 = vmatprep.subr.mxu0 %v1355
    %1707 = vmatpush1.msra.mxu0 %v1354
    %1708 = vmatprep.subr.mxu0 0.0
    %1709 = vmatpush2.msra.mxu0 0.0
    %1710 = vmatprep.subr.mxu0 0.0
    %1711 = vmatpush2.msra.mxu0 0.0
    %1712 = vmatprep.subr.mxu0 0.0
    %1713 = vmatpush2.msra.mxu0 0.0
    %1714 = vmatprep.subr.mxu0 0.0
    %1715 = vmatpush2.msra.mxu0 0.0
    %1716 = vmatprep.subr.mxu0 0.0
    %1717 = vmatpush2.msra.mxu0 0.0
    %1718 = vmatprep.subr.mxu0 0.0
    %1719 = vmatpush2.msra.mxu0 0.0
    %1720 = vmatprep.subr.mxu0 0.0
    %1721 = vmatpush2.msra.mxu0 0.0
    %1722 = vmatprep.subr.mxu0 0.0
    %1723 = vmatpush2.msra.mxu0 0.0
    %1724 = vmatprep.subr.mxu0 0.0
    %1725 = vmatpush2.msra.mxu0 0.0
    %1726 = vmatprep.subr.mxu0 0.0
    %1727 = vmatpush2.msra.mxu0 0.0
    %1728 = vmatprep.subr.mxu0 0.0
    %1729 = vmatpush2.msra.mxu0 0.0
    %1730 = vmatprep.subr.mxu0 0.0
    %1731 = vmatpush2.msra.mxu0 0.0
    %1732 = vmatprep.subr.mxu0 0.0
    %1733 = vmatpush2.msra.mxu0 0.0
    %1734 = vmatprep.subr.mxu0 0.0
    %1735 = vmatpush2.msra.mxu0 0.0
    %1736 = vmatprep.subr.mxu0 0.0
    %1737 = vmatpush2.msra.mxu0 0.0
    %1738 = vmatprep.subr.mxu0 0.0
    %1739 = vmatpush2.msra.mxu0 0.0
    %1740 = vmatprep.mubr.f32.mxu0 0.0
    %1741 = vmatmul.mubr.f32.gmra.mxu0 %v1674
    %v1742 = vpop.f32.mrf.mxu0
    %v1743 = vadd.f32 0.0, %v1742
    %v1744 = vpop.f32.mrf.mxu0
    %v1745 = vadd.f32 0.0, %v1744
    %1746 = vdwg.mxu0
    %v1747 = vadd.f32 %v1060, %v1743
    %v1748 = vadd.f32 %v1061, %v1745
    %v1749 = vxor.u32 %v1747, 2147483648
    %v1750 = vmul.f32 %v1749, 1.442695
    %v1751 = vpow.pop %v1750
    %v1752 = vadd.f32 %v1751, 1.0
    %v1753 = vrcp.pop %v1752
    %v1754 = vmul.f32 1.0, %v1753
    %v1755 = vtanh.pop %v1748
    %v1756 = vxor.u32 %v1748, 2147483648
    %v1757 = vmul.f32 %v1756, 1.442695
    %v1758 = vpow.pop %v1757
    %v1759 = vadd.f32 %v1758, 1.0
    %v1760 = vrcp.pop %v1759
    %v1761 = vmul.f32 1.0, %v1760
    %v1762 = vmul.f32 %v1754, %v1667
    %v1763 = vmul.f32 %v1754, %v1755
    %1765 = vrot.lane.b32.xlu0 %v1763, 64
    %v1766 = vpop.permute.xlu0 %1765
    %v1768 = vadd.f32 %v1762, %v1766
    %v1769 = vtanh.pop %v1768
    %v1770 = vmul.f32 %v1761, %v1769
    %v1771 = vmax.f32 %v1670, %v1770
    %1773 = vrot.lane.b32.xlu0 %v1770, 64
    %v1774 = vpop.permute.xlu0 %1773
    %v1775 = vsel %vm1370, %v1774, 0
    %1777 = vmatprep.subr.mxu0 0.0
    %1778 = vmatpush1.msra.mxu0 0.0
    %1779 = vmatprep.subr.mxu0 0.0
    %1780 = vmatpush1.msra.mxu0 0.0
    %1781 = vmatprep.subr.mxu0 0.0
    %1782 = vmatpush1.msra.mxu0 0.0
    %1783 = vmatprep.subr.mxu0 0.0
    %1784 = vmatpush1.msra.mxu0 0.0
    %1785 = vmatprep.subr.mxu0 0.0
    %1786 = vmatpush1.msra.mxu0 0.0
    %1787 = vmatprep.subr.mxu0 0.0
    %1788 = vmatpush1.msra.mxu0 0.0
    %1789 = vmatprep.subr.mxu0 0.0
    %1790 = vmatpush1.msra.mxu0 0.0
    %1791 = vmatprep.subr.mxu0 0.0
    %1792 = vmatpush1.msra.mxu0 0.0
    %1793 = vmatprep.subr.mxu0 %v1369
    %1794 = vmatpush1.msra.mxu0 %v1368
    %1795 = vmatprep.subr.mxu0 %v1367
    %1796 = vmatpush1.msra.mxu0 %v1366
    %1797 = vmatprep.subr.mxu0 %v1365
    %1798 = vmatpush1.msra.mxu0 %v1364
    %1799 = vmatprep.subr.mxu0 %v1363
    %1800 = vmatpush1.msra.mxu0 %v1362
    %1801 = vmatprep.subr.mxu0 %v1361
    %1802 = vmatpush1.msra.mxu0 %v1360
    %1803 = vmatprep.subr.mxu0 %v1359
    %1804 = vmatpush1.msra.mxu0 %v1358
    %1805 = vmatprep.subr.mxu0 %v1357
    %1806 = vmatpush1.msra.mxu0 %v1356
    %1807 = vmatprep.subr.mxu0 %v1355
    %1808 = vmatpush1.msra.mxu0 %v1354
    %1809 = vmatprep.subr.mxu0 0.0
    %1810 = vmatpush2.msra.mxu0 0.0
    %1811 = vmatprep.subr.mxu0 0.0
    %1812 = vmatpush2.msra.mxu0 0.0
    %1813 = vmatprep.subr.mxu0 0.0
    %1814 = vmatpush2.msra.mxu0 0.0
    %1815 = vmatprep.subr.mxu0 0.0
    %1816 = vmatpush2.msra.mxu0 0.0
    %1817 = vmatprep.subr.mxu0 0.0
    %1818 = vmatpush2.msra.mxu0 0.0
    %1819 = vmatprep.subr.mxu0 0.0
    %1820 = vmatpush2.msra.mxu0 0.0
    %1821 = vmatprep.subr.mxu0 0.0
    %1822 = vmatpush2.msra.mxu0 0.0
    %1823 = vmatprep.subr.mxu0 0.0
    %1824 = vmatpush2.msra.mxu0 0.0
    %1825 = vmatprep.subr.mxu0 0.0
    %1826 = vmatpush2.msra.mxu0 0.0
    %1827 = vmatprep.subr.mxu0 0.0
    %1828 = vmatpush2.msra.mxu0 0.0
    %1829 = vmatprep.subr.mxu0 0.0
    %1830 = vmatpush2.msra.mxu0 0.0
    %1831 = vmatprep.subr.mxu0 0.0
    %1832 = vmatpush2.msra.mxu0 0.0
    %1833 = vmatprep.subr.mxu0 0.0
    %1834 = vmatpush2.msra.mxu0 0.0
    %1835 = vmatprep.subr.mxu0 0.0
    %1836 = vmatpush2.msra.mxu0 0.0
    %1837 = vmatprep.subr.mxu0 0.0
    %1838 = vmatpush2.msra.mxu0 0.0
    %1839 = vmatprep.subr.mxu0 0.0
    %1840 = vmatpush2.msra.mxu0 0.0
    %1841 = vmatprep.mubr.f32.mxu0 0.0
    %1842 = vmatmul.mubr.f32.gmra.mxu0 %v1775
    %v1843 = vpop.f32.mrf.mxu0
    %v1844 = vadd.f32 0.0, %v1843
    %v1845 = vpop.f32.mrf.mxu0
    %v1846 = vadd.f32 0.0, %v1845
    %1847 = vdwg.mxu0
    %v1848 = vadd.f32 %v1133, %v1844
    %v1849 = vadd.f32 %v1134, %v1846
    %v1850 = vxor.u32 %v1848, 2147483648
    %v1851 = vmul.f32 %v1850, 1.442695
    %v1852 = vpow.pop %v1851
    %v1853 = vadd.f32 %v1852, 1.0
    %v1854 = vrcp.pop %v1853
    %v1855 = vmul.f32 1.0, %v1854
    %v1856 = vtanh.pop %v1849
    %v1857 = vxor.u32 %v1849, 2147483648
    %v1858 = vmul.f32 %v1857, 1.442695
    %v1859 = vpow.pop %v1858
    %v1860 = vadd.f32 %v1859, 1.0
    %v1861 = vrcp.pop %v1860
    %v1862 = vmul.f32 1.0, %v1861
    %v1863 = vmul.f32 %v1855, %v1768
    %v1864 = vmul.f32 %v1855, %v1856
    %1866 = vrot.lane.b32.xlu0 %v1864, 64
    %v1867 = vpop.permute.xlu0 %1866
    %v1869 = vadd.f32 %v1863, %v1867
    %v1870 = vtanh.pop %v1869
    %v1871 = vmul.f32 %v1862, %v1870
    %v1872 = vmax.f32 %v1771, %v1871
    %1874 = vrot.lane.b32.xlu0 %v1871, 64
    %v1875 = vpop.permute.xlu0 %1874
    %v1876 = vsel %vm1370, %v1875, 0
    %1878 = vmatprep.subr.mxu0 0.0
    %1879 = vmatpush1.msra.mxu0 0.0
    %1880 = vmatprep.subr.mxu0 0.0
    %1881 = vmatpush1.msra.mxu0 0.0
    %1882 = vmatprep.subr.mxu0 0.0
    %1883 = vmatpush1.msra.mxu0 0.0
    %1884 = vmatprep.subr.mxu0 0.0
    %1885 = vmatpush1.msra.mxu0 0.0
    %1886 = vmatprep.subr.mxu0 0.0
    %1887 = vmatpush1.msra.mxu0 0.0
    %1888 = vmatprep.subr.mxu0 0.0
    %1889 = vmatpush1.msra.mxu0 0.0
    %1890 = vmatprep.subr.mxu0 0.0
    %1891 = vmatpush1.msra.mxu0 0.0
    %1892 = vmatprep.subr.mxu0 0.0
    %1893 = vmatpush1.msra.mxu0 0.0
    %1894 = vmatprep.subr.mxu0 %v1369
    %1895 = vmatpush1.msra.mxu0 %v1368
    %1896 = vmatprep.subr.mxu0 %v1367
    %1897 = vmatpush1.msra.mxu0 %v1366
    %1898 = vmatprep.subr.mxu0 %v1365
    %1899 = vmatpush1.msra.mxu0 %v1364
    %1900 = vmatprep.subr.mxu0 %v1363
    %1901 = vmatpush1.msra.mxu0 %v1362
    %1902 = vmatprep.subr.mxu0 %v1361
    %1903 = vmatpush1.msra.mxu0 %v1360
    %1904 = vmatprep.subr.mxu0 %v1359
    %1905 = vmatpush1.msra.mxu0 %v1358
    %1906 = vmatprep.subr.mxu0 %v1357
    %1907 = vmatpush1.msra.mxu0 %v1356
    %1908 = vmatprep.subr.mxu0 %v1355
    %1909 = vmatpush1.msra.mxu0 %v1354
    %1910 = vmatprep.subr.mxu0 0.0
    %1911 = vmatpush2.msra.mxu0 0.0
    %1912 = vmatprep.subr.mxu0 0.0
    %1913 = vmatpush2.msra.mxu0 0.0
    %1914 = vmatprep.subr.mxu0 0.0
    %1915 = vmatpush2.msra.mxu0 0.0
    %1916 = vmatprep.subr.mxu0 0.0
    %1917 = vmatpush2.msra.mxu0 0.0
    %1918 = vmatprep.subr.mxu0 0.0
    %1919 = vmatpush2.msra.mxu0 0.0
    %1920 = vmatprep.subr.mxu0 0.0
    %1921 = vmatpush2.msra.mxu0 0.0
    %1922 = vmatprep.subr.mxu0 0.0
    %1923 = vmatpush2.msra.mxu0 0.0
    %1924 = vmatprep.subr.mxu0 0.0
    %1925 = vmatpush2.msra.mxu0 0.0
    %1926 = vmatprep.subr.mxu0 0.0
    %1927 = vmatpush2.msra.mxu0 0.0
    %1928 = vmatprep.subr.mxu0 0.0
    %1929 = vmatpush2.msra.mxu0 0.0
    %1930 = vmatprep.subr.mxu0 0.0
    %1931 = vmatpush2.msra.mxu0 0.0
    %1932 = vmatprep.subr.mxu0 0.0
    %1933 = vmatpush2.msra.mxu0 0.0
    %1934 = vmatprep.subr.mxu0 0.0
    %1935 = vmatpush2.msra.mxu0 0.0
    %1936 = vmatprep.subr.mxu0 0.0
    %1937 = vmatpush2.msra.mxu0 0.0
    %1938 = vmatprep.subr.mxu0 0.0
    %1939 = vmatpush2.msra.mxu0 0.0
    %1940 = vmatprep.subr.mxu0 0.0
    %1941 = vmatpush2.msra.mxu0 0.0
    %1942 = vmatprep.mubr.f32.mxu0 0.0
    %1943 = vmatmul.mubr.f32.gmra.mxu0 %v1876
    %v1944 = vpop.f32.mrf.mxu0
    %v1945 = vadd.f32 0.0, %v1944
    %v1946 = vpop.f32.mrf.mxu0
    %v1947 = vadd.f32 0.0, %v1946
    %1948 = vdwg.mxu0
    %v1949 = vadd.f32 %v1206, %v1945
    %v1950 = vadd.f32 %v1207, %v1947
    %v1951 = vxor.u32 %v1949, 2147483648
    %v1952 = vmul.f32 %v1951, 1.442695
    %v1953 = vpow.pop %v1952
    %v1954 = vadd.f32 %v1953, 1.0
    %v1955 = vrcp.pop %v1954
    %v1956 = vmul.f32 1.0, %v1955
    %v1957 = vtanh.pop %v1950
    %v1958 = vxor.u32 %v1950, 2147483648
    %v1959 = vmul.f32 %v1958, 1.442695
    %v1960 = vpow.pop %v1959
    %v1961 = vadd.f32 %v1960, 1.0
    %v1962 = vrcp.pop %v1961
    %v1963 = vmul.f32 1.0, %v1962
    %v1964 = vmul.f32 %v1956, %v1869
    %v1965 = vmul.f32 %v1956, %v1957
    %1967 = vrot.lane.b32.xlu0 %v1965, 64
    %v1968 = vpop.permute.xlu0 %1967
    %v1970 = vadd.f32 %v1964, %v1968
    %v1971 = vtanh.pop %v1970
    %v1972 = vmul.f32 %v1963, %v1971
    %v1973 = vmax.f32 %v1872, %v1972
    %1975 = vrot.lane.b32.xlu0 %v1972, 64
    %v1976 = vpop.permute.xlu0 %1975
    %v1977 = vsel %vm1370, %v1976, 0
    %1979 = vmatprep.subr.mxu0 0.0
    %1980 = vmatpush1.msra.mxu0 0.0
    %1981 = vmatprep.subr.mxu0 0.0
    %1982 = vmatpush1.msra.mxu0 0.0
    %1983 = vmatprep.subr.mxu0 0.0
    %1984 = vmatpush1.msra.mxu0 0.0
    %1985 = vmatprep.subr.mxu0 0.0
    %1986 = vmatpush1.msra.mxu0 0.0
    %1987 = vmatprep.subr.mxu0 0.0
    %1988 = vmatpush1.msra.mxu0 0.0
    %1989 = vmatprep.subr.mxu0 0.0
    %1990 = vmatpush1.msra.mxu0 0.0
    %1991 = vmatprep.subr.mxu0 0.0
    %1992 = vmatpush1.msra.mxu0 0.0
    %1993 = vmatprep.subr.mxu0 0.0
    %1994 = vmatpush1.msra.mxu0 0.0
    %1995 = vmatprep.subr.mxu0 %v1369
    %1996 = vmatpush1.msra.mxu0 %v1368
    %1997 = vmatprep.subr.mxu0 %v1367
    %1998 = vmatpush1.msra.mxu0 %v1366
    %1999 = vmatprep.subr.mxu0 %v1365
    %2000 = vmatpush1.msra.mxu0 %v1364
    %2001 = vmatprep.subr.mxu0 %v1363
    %2002 = vmatpush1.msra.mxu0 %v1362
    %2003 = vmatprep.subr.mxu0 %v1361
    %2004 = vmatpush1.msra.mxu0 %v1360
    %2005 = vmatprep.subr.mxu0 %v1359
    %2006 = vmatpush1.msra.mxu0 %v1358
    %2007 = vmatprep.subr.mxu0 %v1357
    %2008 = vmatpush1.msra.mxu0 %v1356
    %2009 = vmatprep.subr.mxu0 %v1355
    %2010 = vmatpush1.msra.mxu0 %v1354
    %2011 = vmatprep.subr.mxu0 0.0
    %2012 = vmatpush2.msra.mxu0 0.0
    %2013 = vmatprep.subr.mxu0 0.0
    %2014 = vmatpush2.msra.mxu0 0.0
    %2015 = vmatprep.subr.mxu0 0.0
    %2016 = vmatpush2.msra.mxu0 0.0
    %2017 = vmatprep.subr.mxu0 0.0
    %2018 = vmatpush2.msra.mxu0 0.0
    %2019 = vmatprep.subr.mxu0 0.0
    %2020 = vmatpush2.msra.mxu0 0.0
    %2021 = vmatprep.subr.mxu0 0.0
    %2022 = vmatpush2.msra.mxu0 0.0
    %2023 = vmatprep.subr.mxu0 0.0
    %2024 = vmatpush2.msra.mxu0 0.0
    %2025 = vmatprep.subr.mxu0 0.0
    %2026 = vmatpush2.msra.mxu0 0.0
    %2027 = vmatprep.subr.mxu0 0.0
    %2028 = vmatpush2.msra.mxu0 0.0
    %2029 = vmatprep.subr.mxu0 0.0
    %2030 = vmatpush2.msra.mxu0 0.0
    %2031 = vmatprep.subr.mxu0 0.0
    %2032 = vmatpush2.msra.mxu0 0.0
    %2033 = vmatprep.subr.mxu0 0.0
    %2034 = vmatpush2.msra.mxu0 0.0
    %2035 = vmatprep.subr.mxu0 0.0
    %2036 = vmatpush2.msra.mxu0 0.0
    %2037 = vmatprep.subr.mxu0 0.0
    %2038 = vmatpush2.msra.mxu0 0.0
    %2039 = vmatprep.subr.mxu0 0.0
    %2040 = vmatpush2.msra.mxu0 0.0
    %2041 = vmatprep.subr.mxu0 0.0
    %2042 = vmatpush2.msra.mxu0 0.0
    %2043 = vmatprep.mubr.f32.mxu0 0.0
    %2044 = vmatmul.mubr.f32.gmra.mxu0 %v1977
    %v2045 = vpop.f32.mrf.mxu0
    %v2046 = vadd.f32 0.0, %v2045
    %v2047 = vpop.f32.mrf.mxu0
    %v2048 = vadd.f32 0.0, %v2047
    %2049 = vdwg.mxu0
    %v2050 = vadd.f32 %v1279, %v2046
    %v2051 = vadd.f32 %v1280, %v2048
    %v2052 = vxor.u32 %v2050, 2147483648
    %v2053 = vmul.f32 %v2052, 1.442695
    %v2054 = vpow.pop %v2053
    %v2055 = vadd.f32 %v2054, 1.0
    %v2056 = vrcp.pop %v2055
    %v2057 = vmul.f32 1.0, %v2056
    %v2058 = vtanh.pop %v2051
    %v2059 = vxor.u32 %v2051, 2147483648
    %v2060 = vmul.f32 %v2059, 1.442695
    %v2061 = vpow.pop %v2060
    %v2062 = vadd.f32 %v2061, 1.0
    %v2063 = vrcp.pop %v2062
    %v2064 = vmul.f32 1.0, %v2063
    %v2065 = vmul.f32 %v2057, %v1970
    %v2066 = vmul.f32 %v2057, %v2058
    %2068 = vrot.lane.b32.xlu0 %v2066, 64
    %v2069 = vpop.permute.xlu0 %2068
    %v2071 = vadd.f32 %v2065, %v2069
    %v2072 = vtanh.pop %v2071
    %v2073 = vmul.f32 %v2064, %v2072
    %v2074 = vmax.f32 %v1973, %v2073
    %2076 = vrot.lane.b32.xlu0 %v2073, 64
    %v2077 = vpop.permute.xlu0 %2076
    %v2078 = vsel %vm1370, %v2077, 0
    %2080 = vmatprep.subr.mxu0 0.0
    %2081 = vmatpush1.msra.mxu0 0.0
    %2082 = vmatprep.subr.mxu0 0.0
    %2083 = vmatpush1.msra.mxu0 0.0
    %2084 = vmatprep.subr.mxu0 0.0
    %2085 = vmatpush1.msra.mxu0 0.0
    %2086 = vmatprep.subr.mxu0 0.0
    %2087 = vmatpush1.msra.mxu0 0.0
    %2088 = vmatprep.subr.mxu0 0.0
    %2089 = vmatpush1.msra.mxu0 0.0
    %2090 = vmatprep.subr.mxu0 0.0
    %2091 = vmatpush1.msra.mxu0 0.0
    %2092 = vmatprep.subr.mxu0 0.0
    %2093 = vmatpush1.msra.mxu0 0.0
    %2094 = vmatprep.subr.mxu0 0.0
    %2095 = vmatpush1.msra.mxu0 0.0
    %2096 = vmatprep.subr.mxu0 %v1369
    %2097 = vmatpush1.msra.mxu0 %v1368
    %2098 = vmatprep.subr.mxu0 %v1367
    %2099 = vmatpush1.msra.mxu0 %v1366
    %2100 = vmatprep.subr.mxu0 %v1365
    %2101 = vmatpush1.msra.mxu0 %v1364
    %2102 = vmatprep.subr.mxu0 %v1363
    %2103 = vmatpush1.msra.mxu0 %v1362
    %2104 = vmatprep.subr.mxu0 %v1361
    %2105 = vmatpush1.msra.mxu0 %v1360
    %2106 = vmatprep.subr.mxu0 %v1359
    %2107 = vmatpush1.msra.mxu0 %v1358
    %2108 = vmatprep.subr.mxu0 %v1357
    %2109 = vmatpush1.msra.mxu0 %v1356
    %2110 = vmatprep.subr.mxu0 %v1355
    %2111 = vmatpush1.msra.mxu0 %v1354
    %2112 = vmatprep.subr.mxu0 0.0
    %2113 = vmatpush2.msra.mxu0 0.0
    %2114 = vmatprep.subr.mxu0 0.0
    %2115 = vmatpush2.msra.mxu0 0.0
    %2116 = vmatprep.subr.mxu0 0.0
    %2117 = vmatpush2.msra.mxu0 0.0
    %2118 = vmatprep.subr.mxu0 0.0
    %2119 = vmatpush2.msra.mxu0 0.0
    %2120 = vmatprep.subr.mxu0 0.0
    %2121 = vmatpush2.msra.mxu0 0.0
    %2122 = vmatprep.subr.mxu0 0.0
    %2123 = vmatpush2.msra.mxu0 0.0
    %2124 = vmatprep.subr.mxu0 0.0
    %2125 = vmatpush2.msra.mxu0 0.0
    %2126 = vmatprep.subr.mxu0 0.0
    %2127 = vmatpush2.msra.mxu0 0.0
    %2128 = vmatprep.subr.mxu0 0.0
    %2129 = vmatpush2.msra.mxu0 0.0
    %2130 = vmatprep.subr.mxu0 0.0
    %2131 = vmatpush2.msra.mxu0 0.0
    %2132 = vmatprep.subr.mxu0 0.0
    %2133 = vmatpush2.msra.mxu0 0.0
    %2134 = vmatprep.subr.mxu0 0.0
    %2135 = vmatpush2.msra.mxu0 0.0
    %2136 = vmatprep.subr.mxu0 0.0
    %2137 = vmatpush2.msra.mxu0 0.0
    %2138 = vmatprep.subr.mxu0 0.0
    %2139 = vmatpush2.msra.mxu0 0.0
    %2140 = vmatprep.subr.mxu0 0.0
    %2141 = vmatpush2.msra.mxu0 0.0
    %2142 = vmatprep.subr.mxu0 0.0
    %2143 = vmatpush2.msra.mxu0 0.0
    %2144 = vmatprep.mubr.f32.mxu0 0.0
    %2145 = vmatmul.mubr.f32.gmra.mxu0 %v2078
    %v2146 = vpop.f32.mrf.mxu0
    %v2147 = vadd.f32 0.0, %v2146
    %v2148 = vpop.f32.mrf.mxu0
    %v2149 = vadd.f32 0.0, %v2148
    %2150 = vdwg.mxu0
    %v2151 = vadd.f32 %v1352, %v2147
    %v2152 = vadd.f32 %v1353, %v2149
    %v2153 = vxor.u32 %v2151, 2147483648
    %v2154 = vmul.f32 %v2153, 1.442695
    %v2155 = vpow.pop %v2154
    %v2156 = vadd.f32 %v2155, 1.0
    %v2157 = vrcp.pop %v2156
    %v2158 = vmul.f32 1.0, %v2157
    %v2159 = vtanh.pop %v2152
    %v2160 = vxor.u32 %v2152, 2147483648
    %v2161 = vmul.f32 %v2160, 1.442695
    %v2162 = vpow.pop %v2161
    %v2163 = vadd.f32 %v2162, 1.0
    %v2164 = vrcp.pop %v2163
    %v2165 = vmul.f32 1.0, %v2164
    %v2166 = vmul.f32 %v2158, %v2071
    %v2167 = vmul.f32 %v2158, %v2159
    %2169 = vrot.lane.b32.xlu0 %v2167, 64
    %v2170 = vpop.permute.xlu0 %2169
    %v2172 = vadd.f32 %v2166, %v2170
    %v2173 = vtanh.pop %v2172
    %v2174 = vmul.f32 %v2165, %v2173
    %v2175 = vmax.f32 %v2074, %v2174
    %v2176 = vld [vmem:[#allocation10] sm:$0xff]
    %v2177 = vld [vmem:[#allocation10 + $0x8] sm:$0xff]
    %v2178 = vld [vmem:[#allocation10 + $0x10] sm:$0xff]
    %v2179 = vld [vmem:[#allocation10 + $0x18] sm:$0xff]
    %v2180 = vld [vmem:[#allocation10 + $0x20] sm:$0xff]
    %v2181 = vld [vmem:[#allocation10 + $0x28] sm:$0xff]
    %v2182 = vld [vmem:[#allocation10 + $0x30] sm:$0xff]
    %v2183 = vld [vmem:[#allocation10 + $0x38] sm:$0xff]
    %v2184 = vld [vmem:[%s6] sm:$0x1]
    %v2186 = vlaneseq
    %v2187 = vshrl.u32 %v2186, 7
    %v2188 = vsub.s32 0, %v2187
    %v2189 = vrot.slane %v2184, %v2188
    %2192 = vrot.lane.b32.xlu0 %v2175, 64
    %v2193 = vpop.permute.xlu0 %2192
    %v2194 = vsel %vm1370, %v2193, 0
    %2196 = vmatprep.subr.mxu0 0.0
    %2197 = vmatpush1.msra.mxu0 0.0
    %2198 = vmatprep.subr.mxu0 0.0
    %2199 = vmatpush1.msra.mxu0 0.0
    %2200 = vmatprep.subr.mxu0 0.0
    %2201 = vmatpush1.msra.mxu0 0.0
    %2202 = vmatprep.subr.mxu0 0.0
    %2203 = vmatpush1.msra.mxu0 0.0
    %2204 = vmatprep.subr.mxu0 0.0
    %2205 = vmatpush1.msra.mxu0 0.0
    %2206 = vmatprep.subr.mxu0 0.0
    %2207 = vmatpush1.msra.mxu0 0.0
    %2208 = vmatprep.subr.mxu0 0.0
    %2209 = vmatpush1.msra.mxu0 0.0
    %2210 = vmatprep.subr.mxu0 0.0
    %2211 = vmatpush1.msra.mxu0 0.0
    %2212 = vmatprep.subr.mxu0 0.0
    %2213 = vmatpush1.msra.mxu0 %v2183
    %2214 = vmatprep.subr.mxu0 0.0
    %2215 = vmatpush1.msra.mxu0 %v2182
    %2216 = vmatprep.subr.mxu0 0.0
    %2217 = vmatpush1.msra.mxu0 %v2181
    %2218 = vmatprep.subr.mxu0 0.0
    %2219 = vmatpush1.msra.mxu0 %v2180
    %2220 = vmatprep.subr.mxu0 0.0
    %2221 = vmatpush1.msra.mxu0 %v2179
    %2222 = vmatprep.subr.mxu0 0.0
    %2223 = vmatpush1.msra.mxu0 %v2178
    %2224 = vmatprep.subr.mxu0 0.0
    %2225 = vmatpush1.msra.mxu0 %v2177
    %2226 = vmatprep.subr.mxu0 0.0
    %2227 = vmatpush1.msra.mxu0 %v2176
    %2228 = vmatprep.subr.mxu0 0.0
    %2229 = vmatpush2.msra.mxu0 0.0
    %2230 = vmatprep.subr.mxu0 0.0
    %2231 = vmatpush2.msra.mxu0 0.0
    %2232 = vmatprep.subr.mxu0 0.0
    %2233 = vmatpush2.msra.mxu0 0.0
    %2234 = vmatprep.subr.mxu0 0.0
    %2235 = vmatpush2.msra.mxu0 0.0
    %2236 = vmatprep.subr.mxu0 0.0
    %2237 = vmatpush2.msra.mxu0 0.0
    %2238 = vmatprep.subr.mxu0 0.0
    %2239 = vmatpush2.msra.mxu0 0.0
    %2240 = vmatprep.subr.mxu0 0.0
    %2241 = vmatpush2.msra.mxu0 0.0
    %2242 = vmatprep.subr.mxu0 0.0
    %2243 = vmatpush2.msra.mxu0 0.0
    %2244 = vmatprep.subr.mxu0 0.0
    %2245 = vmatpush2.msra.mxu0 0.0
    %2246 = vmatprep.subr.mxu0 0.0
    %2247 = vmatpush2.msra.mxu0 0.0
    %2248 = vmatprep.subr.mxu0 0.0
    %2249 = vmatpush2.msra.mxu0 0.0
    %2250 = vmatprep.subr.mxu0 0.0
    %2251 = vmatpush2.msra.mxu0 0.0
    %2252 = vmatprep.subr.mxu0 0.0
    %2253 = vmatpush2.msra.mxu0 0.0
    %2254 = vmatprep.subr.mxu0 0.0
    %2255 = vmatpush2.msra.mxu0 0.0
    %2256 = vmatprep.subr.mxu0 0.0
    %2257 = vmatpush2.msra.mxu0 0.0
    %2258 = vmatprep.subr.mxu0 0.0
    %2259 = vmatpush2.msra.mxu0 0.0
    %2260 = vmatprep.mubr.f32.mxu0 0.0
    %2261 = vmatmul.mubr.f32.gmra.mxu0 %v2194
    %v2262 = vpop.f32.mrf.mxu0
    %v2263 = vadd.f32 %v2189, %v2262
    %v2264 = vpop.f32.mrf.mxu0
    %2265 = vdwg.mxu0
    %v2266 = vtanh.pop %v2263
    %v2267 = vld [vmem:[#allocation11] sm:$0xff]
    %v2268 = vld [vmem:[#allocation11 + $0x8] sm:$0xff]
    %v2269 = vld [vmem:[#allocation11 + $0x10] sm:$0xff]
    %v2270 = vld [vmem:[#allocation11 + $0x18] sm:$0xff]
    %v2271 = vld [vmem:[#allocation11 + $0x20] sm:$0xff]
    %v2272 = vld [vmem:[#allocation11 + $0x28] sm:$0xff]
    %v2273 = vld [vmem:[#allocation11 + $0x30] sm:$0xff]
    %v2274 = vld [vmem:[#allocation11 + $0x38] sm:$0xff]
    %v2275 = vld [vmem:[%s8] sm:$0x1]
    %v2277 = vlaneseq
    %v2278 = vshrl.u32 %v2277, 7
    %v2279 = vsub.s32 0, %v2278
    %v2280 = vrot.slane %v2275, %v2279
    %v2283 = vsel %vm1370, %v2266, 0
    %2285 = vmatprep.subr.mxu0 0.0
    %2286 = vmatpush1.msra.mxu0 0.0
    %2287 = vmatprep.subr.mxu0 0.0
    %2288 = vmatpush1.msra.mxu0 0.0
    %2289 = vmatprep.subr.mxu0 0.0
    %2290 = vmatpush1.msra.mxu0 0.0
    %2291 = vmatprep.subr.mxu0 0.0
    %2292 = vmatpush1.msra.mxu0 0.0
    %2293 = vmatprep.subr.mxu0 0.0
    %2294 = vmatpush1.msra.mxu0 0.0
    %2295 = vmatprep.subr.mxu0 0.0
    %2296 = vmatpush1.msra.mxu0 0.0
    %2297 = vmatprep.subr.mxu0 0.0
    %2298 = vmatpush1.msra.mxu0 0.0
    %2299 = vmatprep.subr.mxu0 0.0
    %2300 = vmatpush1.msra.mxu0 0.0
    %2301 = vmatprep.subr.mxu0 0.0
    %2302 = vmatpush1.msra.mxu0 %v2274
    %2303 = vmatprep.subr.mxu0 0.0
    %2304 = vmatpush1.msra.mxu0 %v2273
    %2305 = vmatprep.subr.mxu0 0.0
    %2306 = vmatpush1.msra.mxu0 %v2272
    %2307 = vmatprep.subr.mxu0 0.0
    %2308 = vmatpush1.msra.mxu0 %v2271
    %2309 = vmatprep.subr.mxu0 0.0
    %2310 = vmatpush1.msra.mxu0 %v2270
    %2311 = vmatprep.subr.mxu0 0.0
    %2312 = vmatpush1.msra.mxu0 %v2269
    %2313 = vmatprep.subr.mxu0 0.0
    %2314 = vmatpush1.msra.mxu0 %v2268
    %2315 = vmatprep.subr.mxu0 0.0
    %2316 = vmatpush1.msra.mxu0 %v2267
    %2317 = vmatprep.subr.mxu0 0.0
    %2318 = vmatpush2.msra.mxu0 0.0
    %2319 = vmatprep.subr.mxu0 0.0
    %2320 = vmatpush2.msra.mxu0 0.0
    %2321 = vmatprep.subr.mxu0 0.0
    %2322 = vmatpush2.msra.mxu0 0.0
    %2323 = vmatprep.subr.mxu0 0.0
    %2324 = vmatpush2.msra.mxu0 0.0
    %2325 = vmatprep.subr.mxu0 0.0
    %2326 = vmatpush2.msra.mxu0 0.0
    %2327 = vmatprep.subr.mxu0 0.0
    %2328 = vmatpush2.msra.mxu0 0.0
    %2329 = vmatprep.subr.mxu0 0.0
    %2330 = vmatpush2.msra.mxu0 0.0
    %2331 = vmatprep.subr.mxu0 0.0
    %2332 = vmatpush2.msra.mxu0 0.0
    %2333 = vmatprep.subr.mxu0 0.0
    %2334 = vmatpush2.msra.mxu0 0.0
    %2335 = vmatprep.subr.mxu0 0.0
    %2336 = vmatpush2.msra.mxu0 0.0
    %2337 = vmatprep.subr.mxu0 0.0
    %2338 = vmatpush2.msra.mxu0 0.0
    %2339 = vmatprep.subr.mxu0 0.0
    %2340 = vmatpush2.msra.mxu0 0.0
    %2341 = vmatprep.subr.mxu0 0.0
    %2342 = vmatpush2.msra.mxu0 0.0
    %2343 = vmatprep.subr.mxu0 0.0
    %2344 = vmatpush2.msra.mxu0 0.0
    %2345 = vmatprep.subr.mxu0 0.0
    %2346 = vmatpush2.msra.mxu0 0.0
    %2347 = vmatprep.subr.mxu0 0.0
    %2348 = vmatpush2.msra.mxu0 0.0
    %2349 = vmatprep.mubr.f32.mxu0 0.0
    %2350 = vmatmul.mubr.f32.gmra.mxu0 %v2283
    %v2351 = vpop.f32.mrf.mxu0
    %v2352 = vadd.f32 %v2280, %v2351
    %v2353 = vpop.f32.mrf.mxu0
    %2354 = vdwg.mxu0
    %v2355 = vtanh.pop %v2352
    %v2356 = vld [vmem:[#allocation13] sm:$0xff]
    %v2357 = vld [vmem:[#allocation13 + $0x8] sm:$0xff]
    %v2358 = vld [vmem:[#allocation13 + $0x10] sm:$0xff]
    %v2359 = vld [vmem:[#allocation13 + $0x18] sm:$0xff]
    %v2360 = vld [vmem:[#allocation13 + $0x20] sm:$0xff]
    %v2361 = vld [vmem:[#allocation13 + $0x28] sm:$0xff]
    %v2362 = vld [vmem:[#allocation13 + $0x30] sm:$0xff]
    %v2363 = vld [vmem:[#allocation13 + $0x38] sm:$0xff]
    %v2364 = vld [vmem:[%s10] sm:$0x1]
    %v2366 = vlaneseq
    %v2367 = vshrl.u32 %v2366, 7
    %v2368 = vsub.s32 0, %v2367
    %v2369 = vrot.slane %v2364, %v2368
    %v2372 = vsel %vm1370, %v2355, 0
    %2374 = vmatprep.subr.mxu0 0.0
    %2375 = vmatpush1.msra.mxu0 0.0
    %2376 = vmatprep.subr.mxu0 0.0
    %2377 = vmatpush1.msra.mxu0 0.0
    %2378 = vmatprep.subr.mxu0 0.0
    %2379 = vmatpush1.msra.mxu0 0.0
    %2380 = vmatprep.subr.mxu0 0.0
    %2381 = vmatpush1.msra.mxu0 0.0
    %2382 = vmatprep.subr.mxu0 0.0
    %2383 = vmatpush1.msra.mxu0 0.0
    %2384 = vmatprep.subr.mxu0 0.0
    %2385 = vmatpush1.msra.mxu0 0.0
    %2386 = vmatprep.subr.mxu0 0.0
    %2387 = vmatpush1.msra.mxu0 0.0
    %2388 = vmatprep.subr.mxu0 0.0
    %2389 = vmatpush1.msra.mxu0 0.0
    %2390 = vmatprep.subr.mxu0 0.0
    %2391 = vmatpush1.msra.mxu0 %v2363
    %2392 = vmatprep.subr.mxu0 0.0
    %2393 = vmatpush1.msra.mxu0 %v2362
    %2394 = vmatprep.subr.mxu0 0.0
    %2395 = vmatpush1.msra.mxu0 %v2361
    %2396 = vmatprep.subr.mxu0 0.0
    %2397 = vmatpush1.msra.mxu0 %v2360
    %2398 = vmatprep.subr.mxu0 0.0
    %2399 = vmatpush1.msra.mxu0 %v2359
    %2400 = vmatprep.subr.mxu0 0.0
    %2401 = vmatpush1.msra.mxu0 %v2358
    %2402 = vmatprep.subr.mxu0 0.0
    %2403 = vmatpush1.msra.mxu0 %v2357
    %2404 = vmatprep.subr.mxu0 0.0
    %2405 = vmatpush1.msra.mxu0 %v2356
    %2406 = vmatprep.subr.mxu0 0.0
    %2407 = vmatpush2.msra.mxu0 0.0
    %2408 = vmatprep.subr.mxu0 0.0
    %2409 = vmatpush2.msra.mxu0 0.0
    %2410 = vmatprep.subr.mxu0 0.0
    %2411 = vmatpush2.msra.mxu0 0.0
    %2412 = vmatprep.subr.mxu0 0.0
    %2413 = vmatpush2.msra.mxu0 0.0
    %2414 = vmatprep.subr.mxu0 0.0
    %2415 = vmatpush2.msra.mxu0 0.0
    %2416 = vmatprep.subr.mxu0 0.0
    %2417 = vmatpush2.msra.mxu0 0.0
    %2418 = vmatprep.subr.mxu0 0.0
    %2419 = vmatpush2.msra.mxu0 0.0
    %2420 = vmatprep.subr.mxu0 0.0
    %2421 = vmatpush2.msra.mxu0 0.0
    %2422 = vmatprep.subr.mxu0 0.0
    %2423 = vmatpush2.msra.mxu0 0.0
    %2424 = vmatprep.subr.mxu0 0.0
    %2425 = vmatpush2.msra.mxu0 0.0
    %2426 = vmatprep.subr.mxu0 0.0
    %2427 = vmatpush2.msra.mxu0 0.0
    %2428 = vmatprep.subr.mxu0 0.0
    %2429 = vmatpush2.msra.mxu0 0.0
    %2430 = vmatprep.subr.mxu0 0.0
    %2431 = vmatpush2.msra.mxu0 0.0
    %2432 = vmatprep.subr.mxu0 0.0
    %2433 = vmatpush2.msra.mxu0 0.0
    %2434 = vmatprep.subr.mxu0 0.0
    %2435 = vmatpush2.msra.mxu0 0.0
    %2436 = vmatprep.subr.mxu0 0.0
    %2437 = vmatpush2.msra.mxu0 0.0
    %2438 = vmatprep.mubr.f32.mxu0 0.0
    %2439 = vmatmul.mubr.f32.gmra.mxu0 %v2372
    %v2440 = vpop.f32.mrf.mxu0
    %v2441 = vadd.f32 %v2369, %v2440
    %v2442 = vpop.f32.mrf.mxu0
    %2443 = vdwg.mxu0
    %2444 = vst [vmem:[#allocation14] sm:$0xff] %v2441
    // Predicated region
    $region74: #{tpu_custom_call.1} parent=1 // pred_check
      _
    $region75: #{tpu_custom_call.1} parent=1 // pred_check_branch
      %2446 = sbr.rel (0) target = $region77
    $region76: #{tpu_custom_call.1} parent=1 // pred_region
      %s2448 = ssub.s32 128, 128
      %2449 = vsyncadd [#allocation4], %s2448
      %s2451 = sshll.u32 [#allocation14], 4
      %s2452 = int_to_ptr.vmem [resolvable:$true] %s2451
      %2454 = dma.vmem_to_hbm [thread:$0]  %s2452, 128, %s11, [#allocation4]
    $region77: #{tpu_custom_call.1} parent=1 // pred_fallthru
      _
    // Predicated region
    $region78: #{tpu_custom_call.1} parent=1 // pred_check
      _
    $region79: #{tpu_custom_call.1} parent=1 // pred_check_branch
      %2456 = sbr.rel (0) target = $region81
    $region80: #{tpu_custom_call.1} parent=1 // pred_region
      %2457 = dma.done [#allocation4], 128
    $region81: #{tpu_custom_call.1} parent=1 // pred_fallthru
      _
    %2458 = vsyncpa [#allocation3], 1
    %2459 = vsyncpa [#allocation6], 1
    %2460 = vsyncpa [#allocation9], 1
    %2461 = vsyncpa [#allocation12], 1
    %2462 = vsyncpa [#allocation4], 1

</llo_original>
